<compile_context>
chip_gen: v7x
topology: tpu7x:2x2x1
jax: 0.10.0
libtpu: 0.0.40
codegen_flags: <defaults>
</compile_context>

<pallas_src>
import jax
import jax.numpy as jnp
import numpy as np
from jax.experimental import pallas as pl
from jax.experimental.pallas import tpu as pltpu


def decoder_kernel(ids_ref,                                   # SMEM (B,) int32  (scalar prefetch)
                   embed_hbm,                                 # ANY  (V, E) f32  (stays in HBM)
                   hid_ref, enc_ref,                          # VMEM (B, H), (B, T, H)
                   attn_wh_ref, attn_we_ref, attn_b_ref, v_ref,
                   wih_ref, whh_ref, bih_ref, bhh_ref,
                   outw_ref, outb_ref,                        # (2H, tile_v) bf16 tile, (1, V_pad) f32 resident
                   logp_ref, hnew_ref, attn_ref,              # outputs (B,V_pad), (B,H), (B,T)
                   emb_buf, gather_sem, hc_bf, m_scr, l_scr):
    j = pl.program_id(0)
    n_vt = pl.num_programs(0)
    B, T, H = enc_ref.shape
    tile_v = outw_ref.shape[1]
    f32 = jnp.float32

    @pl.when(j == 0)
    def _phase1():
        # ---- init online-logsumexp accumulators ----
        m_scr[...] = jnp.full_like(m_scr, -jnp.inf)
        l_scr[...] = jnp.zeros_like(l_scr)

        # ---- Embedding lookup: start the B row-gather DMAs now, wait after attention ----
        copies = [pltpu.make_async_copy(embed_hbm.at[pl.ds(ids_ref[b], 1)],
                                        emb_buf.at[pl.ds(b, 1)],
                                        gather_sem.at[b]) for b in range(B)]
        for c in copies:
            c.start()

        hidden = hid_ref[...]                                 # (B, H)
        enc = enc_ref[...]                                    # (B, T, H) batch-major

        # ---- Attention: energy = relu(W_h h + W_e enc + b); score = <energy, v> ----
        h_term = jnp.dot(hidden, attn_wh_ref[...], preferred_element_type=f32)        # (B, H)
        e_term = jnp.dot(enc.reshape(B * T, H), attn_we_ref[...],
                         preferred_element_type=f32).reshape(B, T, H)
        energy = jnp.maximum(e_term + h_term[:, None, :] + attn_b_ref[...], 0.0)
        scores = jnp.sum(energy * v_ref[...], axis=2)                                  # (B, T)

        smax = jnp.max(scores, axis=1, keepdims=True)                                  # (B, 1)
        ex = jnp.exp(scores - smax)
        attn = ex / jnp.sum(ex, axis=1, keepdims=True)                                 # exact softmax
        attn_ref[...] = attn                                                           # lane-dense (B, T)

        context = jnp.sum(attn[:, :, None] * enc, axis=1)                              # (B, H)

        # gather DMAs have been hidden under the attention block above
        for c in copies:
            c.wait()
        embedded = emb_buf[...]                               # (B, E); nn.Dropout == identity (eval)

        # ---- Single-timestep GRU (PyTorch gate order r, z, n); fused W_ih matmul ----
        x = jnp.concatenate([embedded, context], axis=1)                               # (B, E+H)
        gi = jnp.dot(x, wih_ref[...], preferred_element_type=f32) + bih_ref[...]
        gh = jnp.dot(hidden, whh_ref[...], preferred_element_type=f32) + bhh_ref[...]
        r = jax.nn.sigmoid(gi[:, 0:H] + gh[:, 0:H])
        z = jax.nn.sigmoid(gi[:, H:2 * H] + gh[:, H:2 * H])
        n = jnp.tanh(gi[:, 2 * H:3 * H] + r * gh[:, 2 * H:3 * H])
        h_new = (1.0 - z) * n + z * hidden                                             # (B, H)

        hnew_ref[...] = h_new
        hc_bf[...] = jnp.concatenate([h_new, context], axis=1).astype(jnp.bfloat16)    # (B, 2H)

    # ---- Output projection: one fused matmul per vocab tile, written straight into the
    #      resident log-prob block; bias is resident (no per-step bias stream). ----
    col = pl.multiple_of(j * tile_v, tile_v)
    logits_tile = (jnp.dot(hc_bf[...], outw_ref[...], preferred_element_type=f32)
                   + outb_ref[:, pl.ds(col, tile_v)])                                  # (B, tile_v)
    logp_ref[:, pl.ds(col, tile_v)] = logits_tile

    # ---- online max / sum-exp (hides under the next weight-tile DMA) ----
    m_prev = m_scr[...]
    m_new = jnp.maximum(m_prev, jnp.max(logits_tile, axis=1, keepdims=True))
    l_scr[...] = (l_scr[...] * jnp.exp(m_prev - m_new)
                  + jnp.sum(jnp.exp(logits_tile - m_new), axis=1, keepdims=True))
    m_scr[...] = m_new

    # ---- finalize: single in-place subtract pass over the resident logits row ----
    @pl.when(j == n_vt - 1)
    def _finalize():
        logp_ref[...] = logp_ref[...] - (m_scr[...] + jnp.log(l_scr[...]))


def init_params(key, embed_size, hidden_size, output_size):
    """Deterministic synthetic parameters matching the PyTorch module's shapes."""
    E, H, V = embed_size, hidden_size, output_size
    ks = jax.random.split(key, 10)

    def uni(k, shape, bound):
        return jax.random.uniform(k, shape, jnp.float32, -bound, bound)

    p = {}
    p["embed"] = jax.random.normal(ks[0], (V, E), jnp.float32)        # nn.Embedding
    b_attn = 1.0 / np.sqrt(2 * H)
    p["attn_w"] = uni(ks[1], (H, 2 * H), b_attn)                      # attn.weight
    p["attn_b"] = uni(ks[2], (H,), b_attn)                            # attn.bias
    p["v"] = uni(ks[3], (H,), 1.0 / np.sqrt(H))                       # Attention.v
    b_gru = 1.0 / np.sqrt(H)
    p["w_ih"] = uni(ks[4], (3 * H, E + H), b_gru)                     # gru.weight_ih_l0
    p["w_hh"] = uni(ks[5], (3 * H, H), b_gru)                         # gru.weight_hh_l0
    p["b_ih"] = uni(ks[6], (3 * H,), b_gru)
    p["b_hh"] = uni(ks[7], (3 * H,), b_gru)
    b_out = 1.0 / np.sqrt(2 * H)
    p["out_w"] = uni(ks[8], (V, 2 * H), b_out)                        # out.weight
    p["out_b"] = uni(ks[9], (V,), b_out)                              # out.bias
    return p


def prepare_params(params, *, tile_v=256):
    """One-time weight layout prep: transpose / fuse / pad / bf16 cast (done once, not per step)."""
    V, E = params["embed"].shape
    H = params["w_hh"].shape[1]
    v_pad = pl.cdiv(V, tile_v) * tile_v

    attn_wT = params["attn_w"].T                       # (2H, H): rows 0:H = hidden half, H:2H = encoder half
    out_wT = params["out_w"].T                         # (2H, V): rows 0:H multiply h_new, H:2H multiply context
    out_b = params["out_b"]
    if v_pad != V:
        pad = v_pad - V
        out_wT = jnp.pad(out_wT, ((0, 0), (0, pad)))
        # finite large-negative pad (f32-safe, bf16-representable): pad columns get ~zero probability
        out_b = jnp.pad(out_b, ((0, pad),), constant_values=-1e9)

    return dict(
        embed=params["embed"],                         # (V, E) f32; stays in HBM, gathered in-kernel
        attn_wh=attn_wT[:H], attn_we=attn_wT[H:],      # hidden / encoder halves (H, H)
        attn_b=params["attn_b"].reshape(1, H),
        v=params["v"].reshape(1, H),
        w_ih=params["w_ih"].T,                         # (E+H, 3H) fused (embedded | context)
        w_hh=params["w_hh"].T,                         # (H, 3H)
        b_ih=params["b_ih"].reshape(1, 3 * H),
        b_hh=params["b_hh"].reshape(1, 3 * H),
        out_w=out_wT.astype(jnp.bfloat16),             # (2H, V_pad) fused bf16 weight, f32 accumulate
        out_b=out_b.reshape(1, v_pad).astype(jnp.float32),
        meta=dict(V=V, V_pad=v_pad, tile_v=tile_v, E=E, H=H),
    )


def decoder_forward(prepped, input_ids, last_hidden, encoder_outputs):
    """input_ids (B,) int32, last_hidden (n_layers, B, H), encoder_outputs (T, B, H) time-major."""
    T, B, H = encoder_outputs.shape
    meta = prepped["meta"]
    V, v_pad, tile_v, E = meta["V"], meta["V_pad"], meta["tile_v"], meta["E"]
    n_vt = v_pad // tile_v
    hidden = last_hidden[-1]                                   # (B, H)
    # one-time layout plumbing: batch-major encoder so in-kernel reshapes are leading-dim
    # merges (no VMEM relayout) and the attention softmax / context reduce are lane/sublane-natural
    enc_bt = jnp.transpose(encoder_outputs, (1, 0, 2))         # (B, T, H)

    const2 = lambda shape: pl.BlockSpec(shape, lambda j, ids: (0, 0))
    const3 = lambda shape: pl.BlockSpec(shape, lambda j, ids: (0, 0, 0))

    grid_spec = pltpu.PrefetchScalarGridSpec(
        num_scalar_prefetch=1,
        grid=(n_vt,),
        in_specs=[
            pl.BlockSpec(memory_space=pl.ANY),        # embedding table stays in HBM
            const2((B, H)),                           # hidden
            const3((B, T, H)),                        # encoder outputs (batch-major)
            const2((H, H)), const2((H, H)),           # attn W (hidden / encoder halves)
            const2((1, H)), const2((1, H)),           # attn bias, v
            const2((E + H, 3 * H)),                   # fused W_ih
            const2((H, 3 * H)),                       # W_hh
            const2((1, 3 * H)), const2((1, 3 * H)),   # b_ih, b_hh
            pl.BlockSpec((2 * H, tile_v), lambda j, ids: (0, j)),   # fused projection weight tile (bf16)
            const2((1, v_pad)),                       # output bias, resident (no per-step stream)
        ],
        out_specs=(
            const2((B, v_pad)),                       # log-probs (resident; tiles written in place)
            const2((B, H)),                           # new hidden state
            const2((B, T)),                           # attention weights (lane-dense)
        ),
        scratch_shapes=[
            pltpu.VMEM((B, E), jnp.float32),          # gathered embedding rows
            pltpu.SemaphoreType.DMA((B,)),            # one DMA sem per gathered row
            pltpu.VMEM((B, 2 * H), jnp.bfloat16),     # concat(h_new, context) reused across vocab tiles
            pltpu.VMEM((B, 1), jnp.float32),          # online row max
            pltpu.VMEM((B, 1), jnp.float32),          # online sum-exp
        ],
    )

    logp_pad, h_new, attn_bt = pl.pallas_call(
        decoder_kernel,
        out_shape=(
            jax.ShapeDtypeStruct((B, v_pad), jnp.float32),
            jax.ShapeDtypeStruct((B, H), jnp.float32),
            jax.ShapeDtypeStruct((B, T), jnp.float32),
        ),
        grid_spec=grid_spec,
        compiler_params=pltpu.CompilerParams(
            # vocab axis carries phase-1 state + the online logsumexp -> must stay sequential
            dimension_semantics=("arbitrary",),
            vmem_limit_bytes=32 * 1024 * 1024,
        ),
    )(
        input_ids.astype(jnp.int32),
        prepped["embed"], hidden, enc_bt,
        prepped["attn_wh"], prepped["attn_we"], prepped["attn_b"], prepped["v"],
        prepped["w_ih"], prepped["w_hh"], prepped["b_ih"], prepped["b_hh"],
        prepped["out_w"], prepped["out_b"],
    )

    logp = logp_pad[:, :V]
    hidden_out = h_new[None]                                # (n_layers=1, B, H)
    attn_weights = attn_bt[:, None, :]                      # (B, 1, T), as in PyTorch
    return logp, hidden_out, attn_weights


def decoder_reference(params, input_ids, last_hidden, encoder_outputs):
    """Pure-JAX mirror of the PyTorch forward (with the same bf16 output-projection path)."""
    T, B, H = encoder_outputs.shape
    embedded = params["embed"][input_ids]                   # (B, E)
    hidden = last_hidden[-1]                                # (B, H)
    enc = jnp.transpose(encoder_outputs, (1, 0, 2))         # (B, T, H)
    h_rep = jnp.broadcast_to(hidden[:, None, :], (B, T, H))
    cat = jnp.concatenate([h_rep, enc], axis=2)
    energy = jax.nn.relu(cat @ params["attn_w"].T + params["attn_b"])
    scores = jnp.einsum("bth,h->bt", energy, params["v"])
    attn = jax.nn.softmax(scores, axis=1)
    context = jnp.einsum("bt,bth->bh", attn, enc)
    x = jnp.concatenate([embedded, context], axis=1)
    gi = x @ params["w_ih"].T + params["b_ih"]
    gh = hidden @ params["w_hh"].T + params["b_hh"]
    r = jax.nn.sigmoid(gi[:, :H] + gh[:, :H])
    z = jax.nn.sigmoid(gi[:, H:2 * H] + gh[:, H:2 * H])
    n = jnp.tanh(gi[:, 2 * H:] + r * gh[:, 2 * H:])
    h_new = (1.0 - z) * n + z * hidden
    out_in = jnp.concatenate([h_new, context], axis=1)
    logits = jnp.dot(out_in.astype(jnp.bfloat16),
                     params["out_w"].T.astype(jnp.bfloat16),
                     preferred_element_type=jnp.float32) + params["out_b"]
    logp = jax.nn.log_softmax(logits, axis=1)
    return logp, h_new[None], attn[:, None, :]


if __name__ == "__main__":
    B, T = 4, 8                 # batch, encoder timesteps
    E, H, V = 32, 32, 500       # embed, hidden, vocab (V > tile so the vocab grid + padding run)
    n_layers = 1
    TILE_V = 256                # 256-multiple matches the v6e/v7x 2x256 MXU (also 128-aligned for v5e)

    key = jax.random.PRNGKey(0)
    kp, ki, kh, ke = jax.random.split(key, 4)
    params = init_params(kp, E, H, V)
    input_ids = jax.random.randint(ki, (B,), 0, V, dtype=jnp.int32)
    last_hidden = jax.random.normal(kh, (n_layers, B, H), jnp.float32)
    encoder_outputs = jax.random.normal(ke, (T, B, H), jnp.float32)

    prepped = prepare_params(params, tile_v=TILE_V)
    logp, hidden_out, attn_w = decoder_forward(prepped, input_ids, last_hidden, encoder_outputs)
    jax.block_until_ready((logp, hidden_out, attn_w))

    ref_logp, ref_h, ref_attn = decoder_reference(params, input_ids, last_hidden, encoder_outputs)
    # Tolerance covers the bf16 (f32-accumulated) output projection, which the reference mirrors.
    np.testing.assert_allclose(np.asarray(logp), np.asarray(ref_logp), rtol=2e-3, atol=2e-3)
    np.testing.assert_allclose(np.asarray(hidden_out), np.asarray(ref_h), rtol=2e-3, atol=2e-3)
    np.testing.assert_allclose(np.asarray(attn_w), np.asarray(ref_attn), rtol=2e-3, atol=2e-3)

    print("KERNEL_OK")
</pallas_src>

<mosaic_0001>
module attributes {stable_mosaic.version = 11 : i64} {
  func.func @decoder_kernel(%arg0: i32, %arg1: memref<4xi32, #tpu.memory_space<smem>>, %arg2: memref<500x32xf32, #tpu.memory_space<any>>, %arg3: memref<4x32xf32, #tpu.memory_space<vmem>>, %arg4: memref<4x8x32xf32, #tpu.memory_space<vmem>>, %arg5: memref<32x32xf32, #tpu.memory_space<vmem>>, %arg6: memref<32x32xf32, #tpu.memory_space<vmem>>, %arg7: memref<1x32xf32, #tpu.memory_space<vmem>>, %arg8: memref<1x32xf32, #tpu.memory_space<vmem>>, %arg9: memref<64x96xf32, #tpu.memory_space<vmem>>, %arg10: memref<32x96xf32, #tpu.memory_space<vmem>>, %arg11: memref<1x96xf32, #tpu.memory_space<vmem>>, %arg12: memref<1x96xf32, #tpu.memory_space<vmem>>, %arg13: memref<64x256xbf16, #tpu.memory_space<vmem>>, %arg14: memref<1x512xf32, #tpu.memory_space<vmem>>, %arg15: memref<4x512xf32, #tpu.memory_space<vmem>>, %arg16: memref<4x32xf32, #tpu.memory_space<vmem>>, %arg17: memref<4x8xf32, #tpu.memory_space<vmem>>, %arg18: memref<4x32xf32, #tpu.memory_space<vmem>>, %arg19: memref<4x!tpu.dma_semaphore, #tpu.memory_space<semaphore_mem>>, %arg20: memref<4x64xbf16, #tpu.memory_space<vmem>>, %arg21: memref<4x1xf32, #tpu.memory_space<vmem>>, %arg22: memref<4x1xf32, #tpu.memory_space<vmem>>) attributes {dimension_semantics = [#tpu.dimension_semantics<arbitrary>], iteration_bounds = array<i64: 2>, scalar_prefetch = 1 : i64, scratch_operands = 5 : i64, tpu.core_type = #tpu.core_type<tc>, window_params = [{}, {pipeline_mode = #tpu.pipeline_mode<synchronous>, transform_indices = @transform_1, window_bounds = array<i64: 4, 32>}, {pipeline_mode = #tpu.pipeline_mode<synchronous>, transform_indices = @transform_2, window_bounds = array<i64: 4, 8, 32>}, {pipeline_mode = #tpu.pipeline_mode<synchronous>, transform_indices = @transform_3, window_bounds = array<i64: 32, 32>}, {pipeline_mode = #tpu.pipeline_mode<synchronous>, transform_indices = @transform_4, window_bounds = array<i64: 32, 32>}, {pipeline_mode = #tpu.pipeline_mode<synchronous>, transform_indices = @transform_5, window_bounds = array<i64: 1, 32>}, {pipeline_mode = #tpu.pipeline_mode<synchronous>, transform_indices = @transform_6, window_bounds = array<i64: 1, 32>}, {pipeline_mode = #tpu.pipeline_mode<synchronous>, transform_indices = @transform_7, window_bounds = array<i64: 64, 96>}, {pipeline_mode = #tpu.pipeline_mode<synchronous>, transform_indices = @transform_8, window_bounds = array<i64: 32, 96>}, {pipeline_mode = #tpu.pipeline_mode<synchronous>, transform_indices = @transform_9, window_bounds = array<i64: 1, 96>}, {pipeline_mode = #tpu.pipeline_mode<synchronous>, transform_indices = @transform_10, window_bounds = array<i64: 1, 96>}, {transform_indices = @transform_11, window_bounds = array<i64: 64, 256>}, {pipeline_mode = #tpu.pipeline_mode<synchronous>, transform_indices = @transform_12, window_bounds = array<i64: 1, 512>}, {pipeline_mode = #tpu.pipeline_mode<synchronous>, transform_indices = @transform_13, window_bounds = array<i64: 4, 512>}, {pipeline_mode = #tpu.pipeline_mode<synchronous>, transform_indices = @transform_14, window_bounds = array<i64: 4, 32>}, {pipeline_mode = #tpu.pipeline_mode<synchronous>, transform_indices = @transform_15, window_bounds = array<i64: 4, 8>}]} {
    %c0_i32 = arith.constant 0 : i32
    %0 = arith.cmpi eq, %arg0, %c0_i32 : i32
    %1 = arith.extui %0 : i1 to i32
    %c0_i32_0 = arith.constant 0 : i32
    %2 = arith.cmpi ne, %1, %c0_i32_0 : i32
    scf.if %2 {
      %cst_17 = arith.constant 0xFF800000 : f32
      %33 = vector.broadcast %cst_17 : f32 to vector<4x1xf32>
      %c0_18 = arith.constant 0 : index
      %c0_19 = arith.constant 0 : index
      %34 = vector.load %arg21[%c0_18, %c0_19] : memref<4x1xf32, #tpu.memory_space<vmem>>, vector<4x1xf32>
      tpu.vector_store %arg21[%c0_18, %c0_19], %33 {strides = array<i32>} : memref<4x1xf32, #tpu.memory_space<vmem>>, vector<4x1xf32>,
      %cst_20 = arith.constant 0.000000e+00 : f32
      %35 = vector.broadcast %cst_20 : f32 to vector<4x1xf32>
      %c0_21 = arith.constant 0 : index
      %c0_22 = arith.constant 0 : index
      %36 = vector.load %arg22[%c0_21, %c0_22] : memref<4x1xf32, #tpu.memory_space<vmem>>, vector<4x1xf32>
      tpu.vector_store %arg22[%c0_21, %c0_22], %35 {strides = array<i32>} : memref<4x1xf32, #tpu.memory_space<vmem>>, vector<4x1xf32>,
      %c0_23 = arith.constant 0 : index
      %37 = memref.load %arg1[%c0_23] : memref<4xi32, #tpu.memory_space<smem>>
      %c1 = arith.constant 1 : index
      %38 = memref.load %arg1[%c1] : memref<4xi32, #tpu.memory_space<smem>>
      %c2 = arith.constant 2 : index
      %39 = memref.load %arg1[%c2] : memref<4xi32, #tpu.memory_space<smem>>
      %c3 = arith.constant 3 : index
      %40 = memref.load %arg1[%c3] : memref<4xi32, #tpu.memory_space<smem>>
      %c0_i32_24 = arith.constant 0 : i32
      %c0_i32_25 = arith.constant 0 : i32
      %41 = tpu.memref_slice %arg2[%37, %c0_i32_25] : memref<500x32xf32, #tpu.memory_space<any>> -> memref<1x32xf32, #tpu.memory_space<any>>
      %c0_i32_26 = arith.constant 0 : i32
      %c0_i32_27 = arith.constant 0 : i32
      %42 = tpu.memref_slice %arg18[%c0_i32_26, %c0_i32_27] : memref<4x32xf32, #tpu.memory_space<vmem>> -> memref<1x32xf32, #tpu.memory_space<vmem>>
      %43 = tpu.memref_slice %arg19[%c0_i32_24] : memref<4x!tpu.dma_semaphore, #tpu.memory_space<semaphore_mem>> -> memref<1x!tpu.dma_semaphore, #tpu.memory_space<semaphore_mem>>
      %44 = tpu.memref_squeeze %43 : memref<1x!tpu.dma_semaphore, #tpu.memory_space<semaphore_mem>> -> memref<!tpu.dma_semaphore, #tpu.memory_space<semaphore_mem>>
      tpu.enqueue_dma source(%41 : memref<1x32xf32, #tpu.memory_space<any>>) target(%42 : memref<1x32xf32, #tpu.memory_space<vmem>>) target_semaphore(%44 : memref<!tpu.dma_semaphore, #tpu.memory_space<semaphore_mem>>)
      %c1_i32_28 = arith.constant 1 : i32
      %c0_i32_29 = arith.constant 0 : i32
      %45 = tpu.memref_slice %arg2[%38, %c0_i32_29] : memref<500x32xf32, #tpu.memory_space<any>> -> memref<1x32xf32, #tpu.memory_space<any>>
      %c1_i32_30 = arith.constant 1 : i32
      %c0_i32_31 = arith.constant 0 : i32
      %46 = tpu.memref_slice %arg18[%c1_i32_30, %c0_i32_31] : memref<4x32xf32, #tpu.memory_space<vmem>> -> memref<1x32xf32, #tpu.memory_space<vmem>>
      %47 = tpu.memref_slice %arg19[%c1_i32_28] : memref<4x!tpu.dma_semaphore, #tpu.memory_space<semaphore_mem>> -> memref<1x!tpu.dma_semaphore, #tpu.memory_space<semaphore_mem>>
      %48 = tpu.memref_squeeze %47 : memref<1x!tpu.dma_semaphore, #tpu.memory_space<semaphore_mem>> -> memref<!tpu.dma_semaphore, #tpu.memory_space<semaphore_mem>>
      tpu.enqueue_dma source(%45 : memref<1x32xf32, #tpu.memory_space<any>>) target(%46 : memref<1x32xf32, #tpu.memory_space<vmem>>) target_semaphore(%48 : memref<!tpu.dma_semaphore, #tpu.memory_space<semaphore_mem>>)
      %c2_i32 = arith.constant 2 : i32
      %c0_i32_32 = arith.constant 0 : i32
      %49 = tpu.memref_slice %arg2[%39, %c0_i32_32] : memref<500x32xf32, #tpu.memory_space<any>> -> memref<1x32xf32, #tpu.memory_space<any>>
      %c2_i32_33 = arith.constant 2 : i32
      %c0_i32_34 = arith.constant 0 : i32
      %50 = tpu.memref_slice %arg18[%c2_i32_33, %c0_i32_34] : memref<4x32xf32, #tpu.memory_space<vmem>> -> memref<1x32xf32, #tpu.memory_space<vmem>>
      %51 = tpu.memref_slice %arg19[%c2_i32] : memref<4x!tpu.dma_semaphore, #tpu.memory_space<semaphore_mem>> -> memref<1x!tpu.dma_semaphore, #tpu.memory_space<semaphore_mem>>
      %52 = tpu.memref_squeeze %51 : memref<1x!tpu.dma_semaphore, #tpu.memory_space<semaphore_mem>> -> memref<!tpu.dma_semaphore, #tpu.memory_space<semaphore_mem>>
      tpu.enqueue_dma source(%49 : memref<1x32xf32, #tpu.memory_space<any>>) target(%50 : memref<1x32xf32, #tpu.memory_space<vmem>>) target_semaphore(%52 : memref<!tpu.dma_semaphore, #tpu.memory_space<semaphore_mem>>)
      %c3_i32 = arith.constant 3 : i32
      %c0_i32_35 = arith.constant 0 : i32
      %53 = tpu.memref_slice %arg2[%40, %c0_i32_35] : memref<500x32xf32, #tpu.memory_space<any>> -> memref<1x32xf32, #tpu.memory_space<any>>
      %c3_i32_36 = arith.constant 3 : i32
      %c0_i32_37 = arith.constant 0 : i32
      %54 = tpu.memref_slice %arg18[%c3_i32_36, %c0_i32_37] : memref<4x32xf32, #tpu.memory_space<vmem>> -> memref<1x32xf32, #tpu.memory_space<vmem>>
      %55 = tpu.memref_slice %arg19[%c3_i32] : memref<4x!tpu.dma_semaphore, #tpu.memory_space<semaphore_mem>> -> memref<1x!tpu.dma_semaphore, #tpu.memory_space<semaphore_mem>>
      %56 = tpu.memref_squeeze %55 : memref<1x!tpu.dma_semaphore, #tpu.memory_space<semaphore_mem>> -> memref<!tpu.dma_semaphore, #tpu.memory_space<semaphore_mem>>
      tpu.enqueue_dma source(%53 : memref<1x32xf32, #tpu.memory_space<any>>) target(%54 : memref<1x32xf32, #tpu.memory_space<vmem>>) target_semaphore(%56 : memref<!tpu.dma_semaphore, #tpu.memory_space<semaphore_mem>>)
      %c0_38 = arith.constant 0 : index
      %c0_39 = arith.constant 0 : index
      %57 = vector.load %arg3[%c0_38, %c0_39] : memref<4x32xf32, #tpu.memory_space<vmem>>, vector<4x32xf32>
      %c0_40 = arith.constant 0 : index
      %c0_41 = arith.constant 0 : index
      %c0_42 = arith.constant 0 : index
      %58 = vector.load %arg4[%c0_40, %c0_41, %c0_42] : memref<4x8x32xf32, #tpu.memory_space<vmem>>, vector<4x8x32xf32>
      %c0_43 = arith.constant 0 : index
      %c0_44 = arith.constant 0 : index
      %59 = vector.load %arg5[%c0_43, %c0_44] : memref<32x32xf32, #tpu.memory_space<vmem>>, vector<32x32xf32>
      %cst_45 = arith.constant dense<0.000000e+00> : vector<4x32xf32>
      %60 = tpu.matmul %57, %59, %cst_45 {dimension_numbers = #tpu.dot_dimension_numbers<[1], [0], [0], [1], [0, 0, 1, 1], [], []>} : vector<4x32xf32>, vector<32x32xf32>, vector<4x32xf32> -> vector<4x32xf32>
      %61 = vector.shape_cast %58 : vector<4x8x32xf32> to vector<32x32xf32>
      %c0_46 = arith.constant 0 : index
      %c0_47 = arith.constant 0 : index
      %62 = vector.load %arg6[%c0_46, %c0_47] : memref<32x32xf32, #tpu.memory_space<vmem>>, vector<32x32xf32>
      %cst_48 = arith.constant dense<0.000000e+00> : vector<32x32xf32>
      %63 = tpu.matmul %61, %62, %cst_48 {dimension_numbers = #tpu.dot_dimension_numbers<[1], [0], [0], [1], [0, 0, 1, 1], [], []>} : vector<32x32xf32>, vector<32x32xf32>, vector<32x32xf32> -> vector<32x32xf32>
      %64 = vector.shape_cast %63 : vector<32x32xf32> to vector<4x8x32xf32>
      %65 = vector.shape_cast %60 : vector<4x32xf32> to vector<4x1x32xf32>
      %66 = vector.broadcast %65 : vector<4x1x32xf32> to vector<4x8x32xf32>
      %67 = arith.addf %64, %66 : vector<4x8x32xf32>
      %c0_49 = arith.constant 0 : index
      %c0_50 = arith.constant 0 : index
      %68 = vector.load %arg7[%c0_49, %c0_50] : memref<1x32xf32, #tpu.memory_space<vmem>>, vector<1x32xf32>
      %69 = vector.shape_cast %68 : vector<1x32xf32> to vector<1x1x32xf32>
      %70 = vector.broadcast %69 : vector<1x1x32xf32> to vector<4x8x32xf32>
      %71 = arith.addf %67, %70 : vector<4x8x32xf32>
      %cst_51 = arith.constant 0.000000e+00 : f32
      %72 = vector.broadcast %cst_51 : f32 to vector<4x8x32xf32>
      %73 = arith.maximumf %71, %72 : vector<4x8x32xf32>
      %c0_52 = arith.constant 0 : index
      %c0_53 = arith.constant 0 : index
      %74 = vector.load %arg8[%c0_52, %c0_53] : memref<1x32xf32, #tpu.memory_space<vmem>>, vector<1x32xf32>
      %75 = vector.shape_cast %74 : vector<1x32xf32> to vector<1x1x32xf32>
      %76 = vector.broadcast %75 : vector<1x1x32xf32> to vector<4x8x32xf32>
      %77 = arith.mulf %73, %76 : vector<4x8x32xf32>
      %cst_54 = arith.constant dense<0.000000e+00> : vector<4x8xf32>
      %78 = vector.multi_reduction <add>, %77, %cst_54 [2] : vector<4x8x32xf32> to vector<4x8xf32>
      %cst_55 = arith.constant dense<0xFF800000> : vector<4xf32>
      %79 = vector.multi_reduction <maximumf>, %78, %cst_55 [1] : vector<4x8xf32> to vector<4xf32>
      %80 = vector.shape_cast %79 : vector<4xf32> to vector<4x1xf32>
      %81 = vector.broadcast %80 : vector<4x1xf32> to vector<4x8xf32>
      %82 = arith.subf %78, %81 : vector<4x8xf32>
      %83 = math.exp %82 : vector<4x8xf32>
      %cst_56 = arith.constant dense<0.000000e+00> : vector<4xf32>
      %84 = vector.multi_reduction <add>, %83, %cst_56 [1] : vector<4x8xf32> to vector<4xf32>
      %85 = vector.shape_cast %84 : vector<4xf32> to vector<4x1xf32>
      %86 = vector.broadcast %85 : vector<4x1xf32> to vector<4x8xf32>
      %87 = arith.divf %83, %86 : vector<4x8xf32>
      %c0_57 = arith.constant 0 : index
      %c0_58 = arith.constant 0 : index
      %88 = vector.load %arg17[%c0_57, %c0_58] : memref<4x8xf32, #tpu.memory_space<vmem>>, vector<4x8xf32>
      tpu.vector_store %arg17[%c0_57, %c0_58], %87 {strides = array<i32>} : memref<4x8xf32, #tpu.memory_space<vmem>>, vector<4x8xf32>,
      %89 = vector.shape_cast %87 : vector<4x8xf32> to vector<4x8x1xf32>
      %90 = vector.broadcast %89 : vector<4x8x1xf32> to vector<4x8x32xf32>
      %91 = arith.mulf %90, %58 : vector<4x8x32xf32>
      %cst_59 = arith.constant dense<0.000000e+00> : vector<4x32xf32>
      %92 = vector.multi_reduction <add>, %91, %cst_59 [1] : vector<4x8x32xf32> to vector<4x32xf32>
      %c0_i32_60 = arith.constant 0 : i32
      %c0_i32_61 = arith.constant 0 : i32
      %93 = tpu.memref_slice %arg2[%37, %c0_i32_61] : memref<500x32xf32, #tpu.memory_space<any>> -> memref<1x32xf32, #tpu.memory_space<any>>
      %c0_i32_62 = arith.constant 0 : i32
      %c0_i32_63 = arith.constant 0 : i32
      %94 = tpu.memref_slice %arg18[%c0_i32_62, %c0_i32_63] : memref<4x32xf32, #tpu.memory_space<vmem>> -> memref<1x32xf32, #tpu.memory_space<vmem>>
      %95 = tpu.memref_slice %arg19[%c0_i32_60] : memref<4x!tpu.dma_semaphore, #tpu.memory_space<semaphore_mem>> -> memref<1x!tpu.dma_semaphore, #tpu.memory_space<semaphore_mem>>
      %96 = tpu.memref_squeeze %95 : memref<1x!tpu.dma_semaphore, #tpu.memory_space<semaphore_mem>> -> memref<!tpu.dma_semaphore, #tpu.memory_space<semaphore_mem>>
      tpu.wait_dma2 semaphore(%96 : memref<!tpu.dma_semaphore, #tpu.memory_space<semaphore_mem>>) src(%93 : memref<1x32xf32, #tpu.memory_space<any>>) dst(%94 : memref<1x32xf32, #tpu.memory_space<vmem>>)
      %c1_i32_64 = arith.constant 1 : i32
      %c0_i32_65 = arith.constant 0 : i32
      %97 = tpu.memref_slice %arg2[%38, %c0_i32_65] : memref<500x32xf32, #tpu.memory_space<any>> -> memref<1x32xf32, #tpu.memory_space<any>>
      %c1_i32_66 = arith.constant 1 : i32
      %c0_i32_67 = arith.constant 0 : i32
      %98 = tpu.memref_slice %arg18[%c1_i32_66, %c0_i32_67] : memref<4x32xf32, #tpu.memory_space<vmem>> -> memref<1x32xf32, #tpu.memory_space<vmem>>
      %99 = tpu.memref_slice %arg19[%c1_i32_64] : memref<4x!tpu.dma_semaphore, #tpu.memory_space<semaphore_mem>> -> memref<1x!tpu.dma_semaphore, #tpu.memory_space<semaphore_mem>>
      %100 = tpu.memref_squeeze %99 : memref<1x!tpu.dma_semaphore, #tpu.memory_space<semaphore_mem>> -> memref<!tpu.dma_semaphore, #tpu.memory_space<semaphore_mem>>
      tpu.wait_dma2 semaphore(%100 : memref<!tpu.dma_semaphore, #tpu.memory_space<semaphore_mem>>) src(%97 : memref<1x32xf32, #tpu.memory_space<any>>) dst(%98 : memref<1x32xf32, #tpu.memory_space<vmem>>)
      %c2_i32_68 = arith.constant 2 : i32
      %c0_i32_69 = arith.constant 0 : i32
      %101 = tpu.memref_slice %arg2[%39, %c0_i32_69] : memref<500x32xf32, #tpu.memory_space<any>> -> memref<1x32xf32, #tpu.memory_space<any>>
      %c2_i32_70 = arith.constant 2 : i32
      %c0_i32_71 = arith.constant 0 : i32
      %102 = tpu.memref_slice %arg18[%c2_i32_70, %c0_i32_71] : memref<4x32xf32, #tpu.memory_space<vmem>> -> memref<1x32xf32, #tpu.memory_space<vmem>>
      %103 = tpu.memref_slice %arg19[%c2_i32_68] : memref<4x!tpu.dma_semaphore, #tpu.memory_space<semaphore_mem>> -> memref<1x!tpu.dma_semaphore, #tpu.memory_space<semaphore_mem>>
      %104 = tpu.memref_squeeze %103 : memref<1x!tpu.dma_semaphore, #tpu.memory_space<semaphore_mem>> -> memref<!tpu.dma_semaphore, #tpu.memory_space<semaphore_mem>>
      tpu.wait_dma2 semaphore(%104 : memref<!tpu.dma_semaphore, #tpu.memory_space<semaphore_mem>>) src(%101 : memref<1x32xf32, #tpu.memory_space<any>>) dst(%102 : memref<1x32xf32, #tpu.memory_space<vmem>>)
      %c3_i32_72 = arith.constant 3 : i32
      %c0_i32_73 = arith.constant 0 : i32
      %105 = tpu.memref_slice %arg2[%40, %c0_i32_73] : memref<500x32xf32, #tpu.memory_space<any>> -> memref<1x32xf32, #tpu.memory_space<any>>
      %c3_i32_74 = arith.constant 3 : i32
      %c0_i32_75 = arith.constant 0 : i32
      %106 = tpu.memref_slice %arg18[%c3_i32_74, %c0_i32_75] : memref<4x32xf32, #tpu.memory_space<vmem>> -> memref<1x32xf32, #tpu.memory_space<vmem>>
      %107 = tpu.memref_slice %arg19[%c3_i32_72] : memref<4x!tpu.dma_semaphore, #tpu.memory_space<semaphore_mem>> -> memref<1x!tpu.dma_semaphore, #tpu.memory_space<semaphore_mem>>
      %108 = tpu.memref_squeeze %107 : memref<1x!tpu.dma_semaphore, #tpu.memory_space<semaphore_mem>> -> memref<!tpu.dma_semaphore, #tpu.memory_space<semaphore_mem>>
      tpu.wait_dma2 semaphore(%108 : memref<!tpu.dma_semaphore, #tpu.memory_space<semaphore_mem>>) src(%105 : memref<1x32xf32, #tpu.memory_space<any>>) dst(%106 : memref<1x32xf32, #tpu.memory_space<vmem>>)
      %c0_76 = arith.constant 0 : index
      %c0_77 = arith.constant 0 : index
      %109 = vector.load %arg18[%c0_76, %c0_77] : memref<4x32xf32, #tpu.memory_space<vmem>>, vector<4x32xf32>
      %110 = tpu.concatenate %109, %92 in 1 : vector<4x32xf32>, vector<4x32xf32> -> vector<4x64xf32>
      %c0_78 = arith.constant 0 : index
      %c0_79 = arith.constant 0 : index
      %111 = vector.load %arg9[%c0_78, %c0_79] : memref<64x96xf32, #tpu.memory_space<vmem>>, vector<64x96xf32>
      %cst_80 = arith.constant dense<0.000000e+00> : vector<4x96xf32>
      %112 = tpu.matmul %110, %111, %cst_80 {dimension_numbers = #tpu.dot_dimension_numbers<[1], [0], [0], [1], [0, 0, 1, 1], [], []>} : vector<4x64xf32>, vector<64x96xf32>, vector<4x96xf32> -> vector<4x96xf32>
      %c0_81 = arith.constant 0 : index
      %c0_82 = arith.constant 0 : index
      %113 = vector.load %arg11[%c0_81, %c0_82] : memref<1x96xf32, #tpu.memory_space<vmem>>, vector<1x96xf32>
      %114 = vector.broadcast %113 : vector<1x96xf32> to vector<4x96xf32>
      %115 = arith.addf %112, %114 : vector<4x96xf32>
      %c0_83 = arith.constant 0 : index
      %c0_84 = arith.constant 0 : index
      %116 = vector.load %arg10[%c0_83, %c0_84] : memref<32x96xf32, #tpu.memory_space<vmem>>, vector<32x96xf32>
      %cst_85 = arith.constant dense<0.000000e+00> : vector<4x96xf32>
      %117 = tpu.matmul %57, %116, %cst_85 {dimension_numbers = #tpu.dot_dimension_numbers<[1], [0], [0], [1], [0, 0, 1, 1], [], []>} : vector<4x32xf32>, vector<32x96xf32>, vector<4x96xf32> -> vector<4x96xf32>
      %c0_86 = arith.constant 0 : index
      %c0_87 = arith.constant 0 : index
      %118 = vector.load %arg12[%c0_86, %c0_87] : memref<1x96xf32, #tpu.memory_space<vmem>>, vector<1x96xf32>
      %119 = vector.broadcast %118 : vector<1x96xf32> to vector<4x96xf32>
      %120 = arith.addf %117, %119 : vector<4x96xf32>
      %121 = vector.extract_strided_slice %115 {offsets = [0, 0], sizes = [4, 32], strides = [1, 1]} : vector<4x96xf32> to vector<4x32xf32>
      %122 = vector.extract_strided_slice %120 {offsets = [0, 0], sizes = [4, 32], strides = [1, 1]} : vector<4x96xf32> to vector<4x32xf32>
      %123 = arith.addf %121, %122 : vector<4x32xf32>
      %124 = arith.negf %123 : vector<4x32xf32>
      %125 = math.exp %124 : vector<4x32xf32>
      %cst_88 = arith.constant 1.000000e+00 : f32
      %126 = vector.broadcast %cst_88 : f32 to vector<4x32xf32>
      %127 = arith.addf %126, %125 : vector<4x32xf32>
      %128 = arith.divf %126, %127 : vector<4x32xf32>
      %129 = vector.extract_strided_slice %115 {offsets = [0, 32], sizes = [4, 32], strides = [1, 1]} : vector<4x96xf32> to vector<4x32xf32>
      %130 = vector.extract_strided_slice %120 {offsets = [0, 32], sizes = [4, 32], strides = [1, 1]} : vector<4x96xf32> to vector<4x32xf32>
      %131 = arith.addf %129, %130 : vector<4x32xf32>
      %132 = arith.negf %131 : vector<4x32xf32>
      %133 = math.exp %132 : vector<4x32xf32>
      %cst_89 = arith.constant 1.000000e+00 : f32
      %134 = vector.broadcast %cst_89 : f32 to vector<4x32xf32>
      %135 = arith.addf %134, %133 : vector<4x32xf32>
      %136 = arith.divf %134, %135 : vector<4x32xf32>
      %137 = vector.extract_strided_slice %115 {offsets = [0, 64], sizes = [4, 32], strides = [1, 1]} : vector<4x96xf32> to vector<4x32xf32>
      %138 = vector.extract_strided_slice %120 {offsets = [0, 64], sizes = [4, 32], strides = [1, 1]} : vector<4x96xf32> to vector<4x32xf32>
      %139 = arith.mulf %128, %138 : vector<4x32xf32>
      %140 = arith.addf %137, %139 : vector<4x32xf32>
      %141 = math.tanh %140 : vector<4x32xf32>
      %cst_90 = arith.constant 1.000000e+00 : f32
      %142 = vector.broadcast %cst_90 : f32 to vector<4x32xf32>
      %143 = arith.subf %142, %136 : vector<4x32xf32>
      %144 = arith.mulf %143, %141 : vector<4x32xf32>
      %145 = arith.mulf %136, %57 : vector<4x32xf32>
      %146 = arith.addf %144, %145 : vector<4x32xf32>
      %c0_91 = arith.constant 0 : index
      %c0_92 = arith.constant 0 : index
      %147 = vector.load %arg16[%c0_91, %c0_92] : memref<4x32xf32, #tpu.memory_space<vmem>>, vector<4x32xf32>
      tpu.vector_store %arg16[%c0_91, %c0_92], %146 {strides = array<i32>} : memref<4x32xf32, #tpu.memory_space<vmem>>, vector<4x32xf32>,
      %148 = tpu.concatenate %146, %92 in 1 : vector<4x32xf32>, vector<4x32xf32> -> vector<4x64xf32>
      %149 = arith.truncf %148 : vector<4x64xf32> to vector<4x64xbf16>
      %c0_93 = arith.constant 0 : index
      %c0_94 = arith.constant 0 : index
      %150 = vector.load %arg20[%c0_93, %c0_94] : memref<4x64xbf16, #tpu.memory_space<vmem>>, vector<4x64xbf16>
      tpu.vector_store %arg20[%c0_93, %c0_94], %149 {strides = array<i32>} : memref<4x64xbf16, #tpu.memory_space<vmem>>, vector<4x64xbf16>,
    } else {
    }
    %c256_i32 = arith.constant 256 : i32
    %3 = arith.muli %arg0, %c256_i32 : i32
    %4 = tpu.assume_multiple %3, 256 : i32
    %c0 = arith.constant 0 : index
    %c0_1 = arith.constant 0 : index
    %5 = vector.load %arg20[%c0, %c0_1] : memref<4x64xbf16, #tpu.memory_space<vmem>>, vector<4x64xbf16>
    %c0_2 = arith.constant 0 : index
    %c0_3 = arith.constant 0 : index
    %6 = vector.load %arg13[%c0_2, %c0_3] : memref<64x256xbf16, #tpu.memory_space<vmem>>, vector<64x256xbf16>
    %cst = arith.constant dense<0.000000e+00> : vector<4x256xf32>
    %7 = tpu.matmul %5, %6, %cst {dimension_numbers = #tpu.dot_dimension_numbers<[1], [0], [0], [1], [0, 0, 1, 1], [], []>} : vector<4x64xbf16>, vector<64x256xbf16>, vector<4x256xf32> -> vector<4x256xf32>
    %c0_4 = arith.constant 0 : index
    %8 = arith.index_cast %4 : i32 to index
    %9 = vector.load %arg14[%c0_4, %8] : memref<1x512xf32, #tpu.memory_space<vmem>>, vector<1x256xf32>
    %10 = vector.broadcast %9 : vector<1x256xf32> to vector<4x256xf32>
    %11 = arith.addf %7, %10 : vector<4x256xf32>
    %c0_5 = arith.constant 0 : index
    %12 = arith.index_cast %4 : i32 to index
    %13 = vector.load %arg15[%c0_5, %12] : memref<4x512xf32, #tpu.memory_space<vmem>>, vector<4x256xf32>
    tpu.vector_store %arg15[%c0_5, %12], %11 {strides = array<i32>} : memref<4x512xf32, #tpu.memory_space<vmem>>, vector<4x256xf32>,
    %c0_6 = arith.constant 0 : index
    %c0_7 = arith.constant 0 : index
    %14 = vector.load %arg21[%c0_6, %c0_7] : memref<4x1xf32, #tpu.memory_space<vmem>>, vector<4x1xf32>
    %cst_8 = arith.constant dense<0xFF800000> : vector<4xf32>
    %15 = vector.multi_reduction <maximumf>, %11, %cst_8 [1] : vector<4x256xf32> to vector<4xf32>
    %16 = vector.shape_cast %15 : vector<4xf32> to vector<4x1xf32>
    %17 = arith.maximumf %14, %16 : vector<4x1xf32>
    %c0_9 = arith.constant 0 : index
    %c0_10 = arith.constant 0 : index
    %18 = vector.load %arg22[%c0_9, %c0_10] : memref<4x1xf32, #tpu.memory_space<vmem>>, vector<4x1xf32>
    %19 = arith.subf %14, %17 : vector<4x1xf32>
    %20 = math.exp %19 : vector<4x1xf32>
    %21 = arith.mulf %18, %20 : vector<4x1xf32>
    %22 = vector.broadcast %17 : vector<4x1xf32> to vector<4x256xf32>
    %23 = arith.subf %11, %22 : vector<4x256xf32>
    %24 = math.exp %23 : vector<4x256xf32>
    %cst_11 = arith.constant dense<0.000000e+00> : vector<4xf32>
    %25 = vector.multi_reduction <add>, %24, %cst_11 [1] : vector<4x256xf32> to vector<4xf32>
    %26 = vector.shape_cast %25 : vector<4xf32> to vector<4x1xf32>
    %27 = arith.addf %21, %26 : vector<4x1xf32>
    %c0_12 = arith.constant 0 : index
    %c0_13 = arith.constant 0 : index
    %28 = vector.load %arg22[%c0_12, %c0_13] : memref<4x1xf32, #tpu.memory_space<vmem>>, vector<4x1xf32>
    tpu.vector_store %arg22[%c0_12, %c0_13], %27 {strides = array<i32>} : memref<4x1xf32, #tpu.memory_space<vmem>>, vector<4x1xf32>,
    %c0_14 = arith.constant 0 : index
    %c0_15 = arith.constant 0 : index
    %29 = vector.load %arg21[%c0_14, %c0_15] : memref<4x1xf32, #tpu.memory_space<vmem>>, vector<4x1xf32>
    tpu.vector_store %arg21[%c0_14, %c0_15], %17 {strides = array<i32>} : memref<4x1xf32, #tpu.memory_space<vmem>>, vector<4x1xf32>,
    %c1_i32 = arith.constant 1 : i32
    %30 = arith.cmpi eq, %arg0, %c1_i32 : i32
    %31 = arith.extui %30 : i1 to i32
    %c0_i32_16 = arith.constant 0 : i32
    %32 = arith.cmpi ne, %31, %c0_i32_16 : i32
    scf.if %32 {
      %c0_17 = arith.constant 0 : index
      %c0_18 = arith.constant 0 : index
      %33 = vector.load %arg15[%c0_17, %c0_18] : memref<4x512xf32, #tpu.memory_space<vmem>>, vector<4x512xf32>
      %c0_19 = arith.constant 0 : index
      %c0_20 = arith.constant 0 : index
      %34 = vector.load %arg21[%c0_19, %c0_20] : memref<4x1xf32, #tpu.memory_space<vmem>>, vector<4x1xf32>
      %c0_21 = arith.constant 0 : index
      %c0_22 = arith.constant 0 : index
      %35 = vector.load %arg22[%c0_21, %c0_22] : memref<4x1xf32, #tpu.memory_space<vmem>>, vector<4x1xf32>
      %36 = math.log %35 : vector<4x1xf32>
      %37 = arith.addf %34, %36 : vector<4x1xf32>
      %38 = vector.broadcast %37 : vector<4x1xf32> to vector<4x512xf32>
      %39 = arith.subf %33, %38 : vector<4x512xf32>
      %c0_23 = arith.constant 0 : index
      %c0_24 = arith.constant 0 : index
      %40 = vector.load %arg15[%c0_23, %c0_24] : memref<4x512xf32, #tpu.memory_space<vmem>>, vector<4x512xf32>
      tpu.vector_store %arg15[%c0_23, %c0_24], %39 {strides = array<i32>} : memref<4x512xf32, #tpu.memory_space<vmem>>, vector<4x512xf32>,
    } else {
    }
    return
  }
  func.func @transform_1(%arg0: i32, %arg1: memref<4xi32, #tpu.memory_space<smem>>) -> (i32, i32) {
    %c0_i32 = arith.constant 0 : i32
    %c0_i32_0 = arith.constant 0 : i32
    %c0_i32_1 = arith.constant 0 : i32
    return %c0_i32, %c0_i32_0 : i32, i32
  }
  func.func @transform_2(%arg0: i32, %arg1: memref<4xi32, #tpu.memory_space<smem>>) -> (i32, i32, i32) {
    %c0_i32 = arith.constant 0 : i32
    %c0_i32_0 = arith.constant 0 : i32
    %c0_i32_1 = arith.constant 0 : i32
    %c0_i32_2 = arith.constant 0 : i32
    return %c0_i32, %c0_i32_0, %c0_i32_1 : i32, i32, i32
  }
  func.func @transform_3(%arg0: i32, %arg1: memref<4xi32, #tpu.memory_space<smem>>) -> (i32, i32) {
    %c0_i32 = arith.constant 0 : i32
    %c0_i32_0 = arith.constant 0 : i32
    %c0_i32_1 = arith.constant 0 : i32
    return %c0_i32, %c0_i32_0 : i32, i32
  }
  func.func @transform_4(%arg0: i32, %arg1: memref<4xi32, #tpu.memory_space<smem>>) -> (i32, i32) {
    %c0_i32 = arith.constant 0 : i32
    %c0_i32_0 = arith.constant 0 : i32
    %c0_i32_1 = arith.constant 0 : i32
    return %c0_i32, %c0_i32_0 : i32, i32
  }
  func.func @transform_5(%arg0: i32, %arg1: memref<4xi32, #tpu.memory_space<smem>>) -> (i32, i32) {
    %c0_i32 = arith.constant 0 : i32
    %c0_i32_0 = arith.constant 0 : i32
    %c0_i32_1 = arith.constant 0 : i32
    return %c0_i32, %c0_i32_0 : i32, i32
  }
  func.func @transform_6(%arg0: i32, %arg1: memref<4xi32, #tpu.memory_space<smem>>) -> (i32, i32) {
    %c0_i32 = arith.constant 0 : i32
    %c0_i32_0 = arith.constant 0 : i32
    %c0_i32_1 = arith.constant 0 : i32
    return %c0_i32, %c0_i32_0 : i32, i32
  }
  func.func @transform_7(%arg0: i32, %arg1: memref<4xi32, #tpu.memory_space<smem>>) -> (i32, i32) {
    %c0_i32 = arith.constant 0 : i32
    %c0_i32_0 = arith.constant 0 : i32
    %c0_i32_1 = arith.constant 0 : i32
    return %c0_i32, %c0_i32_0 : i32, i32
  }
  func.func @transform_8(%arg0: i32, %arg1: memref<4xi32, #tpu.memory_space<smem>>) -> (i32, i32) {
    %c0_i32 = arith.constant 0 : i32
    %c0_i32_0 = arith.constant 0 : i32
    %c0_i32_1 = arith.constant 0 : i32
    return %c0_i32, %c0_i32_0 : i32, i32
  }
  func.func @transform_9(%arg0: i32, %arg1: memref<4xi32, #tpu.memory_space<smem>>) -> (i32, i32) {
    %c0_i32 = arith.constant 0 : i32
    %c0_i32_0 = arith.constant 0 : i32
    %c0_i32_1 = arith.constant 0 : i32
    return %c0_i32, %c0_i32_0 : i32, i32
  }
  func.func @transform_10(%arg0: i32, %arg1: memref<4xi32, #tpu.memory_space<smem>>) -> (i32, i32) {
    %c0_i32 = arith.constant 0 : i32
    %c0_i32_0 = arith.constant 0 : i32
    %c0_i32_1 = arith.constant 0 : i32
    return %c0_i32, %c0_i32_0 : i32, i32
  }
  func.func @transform_11(%arg0: i32, %arg1: memref<4xi32, #tpu.memory_space<smem>>) -> (i32, i32) {
    %c0_i32 = arith.constant 0 : i32
    %c0_i32_0 = arith.constant 0 : i32
    return %c0_i32, %arg0 : i32, i32
  }
  func.func @transform_12(%arg0: i32, %arg1: memref<4xi32, #tpu.memory_space<smem>>) -> (i32, i32) {
    %c0_i32 = arith.constant 0 : i32
    %c0_i32_0 = arith.constant 0 : i32
    %c0_i32_1 = arith.constant 0 : i32
    return %c0_i32, %c0_i32_0 : i32, i32
  }
  func.func @transform_13(%arg0: i32, %arg1: memref<4xi32, #tpu.memory_space<smem>>) -> (i32, i32) {
    %c0_i32 = arith.constant 0 : i32
    %c0_i32_0 = arith.constant 0 : i32
    %c0_i32_1 = arith.constant 0 : i32
    return %c0_i32, %c0_i32_0 : i32, i32
  }
  func.func @transform_14(%arg0: i32, %arg1: memref<4xi32, #tpu.memory_space<smem>>) -> (i32, i32) {
    %c0_i32 = arith.constant 0 : i32
    %c0_i32_0 = arith.constant 0 : i32
    %c0_i32_1 = arith.constant 0 : i32
    return %c0_i32, %c0_i32_0 : i32, i32
  }
  func.func @transform_15(%arg0: i32, %arg1: memref<4xi32, #tpu.memory_space<smem>>) -> (i32, i32) {
    %c0_i32 = arith.constant 0 : i32
    %c0_i32_0 = arith.constant 0 : i32
    %c0_i32_1 = arith.constant 0 : i32
    return %c0_i32, %c0_i32_0 : i32, i32
  }
}

</mosaic_0001>

<llo_original>
// kernel: tpu_custom_call.1
$region0: #{tpu_custom_call.1}
  #allocation0 [shape = 'u32[]', space=smem, size = 0x4, offset = 0x4, fixed_abs, tag = 'smem constant byte address 0x4 - core index']
  #allocation1 [shape = 'u32[144,128]{1,0:T(1,128)}', space=vmem, size = 0x12000, scoped, tag = 'internal scratch']
  #allocation2 [shape = 'f32[4,32]{1,0:T(4,128)}', space=vmem, size = 0x800, scoped, tag = 'scratch operand']
  #allocation3 [shape = 's32[4]{0}', space=sflag, size = 0x10, scoped, tag = 'scratch operand']
  #allocation4 [shape = 'bf16[4,64]{1,0:T(4,128)(2,1)}', space=vmem, size = 0x400, scoped, tag = 'scratch operand']
  #allocation5 [shape = 'f32[4,1]{1,0:T(4,128)}', space=vmem, size = 0x800, scoped, tag = 'scratch operand']
  #allocation6 [shape = 'f32[4,1]{1,0:T(4,128)}', space=vmem, size = 0x800, scoped, tag = 'scratch operand']
  #allocation7 [shape = 's32[1]{0}', space=sflag, size = 0x4, scoped, tag = 'scoped memory for tpu_custom_call.1']
  #allocation8 [shape = 'u8[512]{0}', space=smem, size = 0x200, scoped, tag = 'prefetched SMEM operand 0']
  #allocation15 [shape = 's32[]', space=sflag, size = 0x4, offset = 0, fixed_abs, tag = 'sflag constant byte address 0x0 - dummy sync flag']
  #allocation16 [shape = 's32[]', space=sflag, size = 0x4, offset = 0, fixed_abs, tag = 'sflag constant byte address 0x0 - dummy sync flag']
  #allocation17 [shape = 's32[]', space=sflag, size = 0x4, offset = 0, fixed_abs, tag = 'sflag constant byte address 0x0 - dummy sync flag']
  #allocation18 [shape = 's32[]', space=sflag, size = 0x4, offset = 0, fixed_abs, tag = 'sflag constant byte address 0x0 - dummy sync flag']
  %s0 = inlined_call_operand.vmem [shape: s32[4], index: 0, kind: input, shape index: {}]
  %s1 = inlined_call_operand.vmem [shape: f32[500,32], index: 1, kind: input, shape index: {}]
  %s2 = inlined_call_operand.vmem [shape: f32[4,32], index: 2, kind: input, shape index: {}]
  %s3 = inlined_call_operand.vmem [shape: f32[4,8,32], index: 3, kind: input, shape index: {}]
  %s4 = inlined_call_operand.vmem [shape: f32[32,32], index: 4, kind: input, shape index: {}]
  %s5 = inlined_call_operand.vmem [shape: f32[32,32], index: 5, kind: input, shape index: {}]
  %s6 = inlined_call_operand.vmem [shape: f32[1,32], index: 6, kind: input, shape index: {}]
  %s7 = inlined_call_operand.vmem [shape: f32[1,32], index: 7, kind: input, shape index: {}]
  %s8 = inlined_call_operand.vmem [shape: f32[64,96], index: 8, kind: input, shape index: {}]
  %s9 = inlined_call_operand.vmem [shape: f32[32,96], index: 9, kind: input, shape index: {}]
  %s10 = inlined_call_operand.vmem [shape: f32[1,96], index: 10, kind: input, shape index: {}]
  %s11 = inlined_call_operand.vmem [shape: f32[1,96], index: 11, kind: input, shape index: {}]
  %s12 = inlined_call_operand.vmem [shape: bf16[64,512], index: 12, kind: input, shape index: {}]
  %s13 = inlined_call_operand.vmem [shape: f32[1,512], index: 13, kind: input, shape index: {}]
  %s14 = inlined_call_operand.hbm [shape: f32[4,512], index: 14, kind: output, shape index: {0}]
  %s15 = inlined_call_operand.hbm [shape: f32[4,32], index: 15, kind: output, shape index: {1}]
  %s16 = inlined_call_operand.hbm [shape: f32[4,8], index: 16, kind: output, shape index: {2}]
  %17 = xla_tuple %s14, %s15, %s16
  %s18 = sld [smem:[#allocation0]]
  $region263: #{tpu_custom_call.1} parent=0
    _
  %s20 = ssub.s32 1, %s18
  %s21 = scalar_select 0, %s20, %s18
  %s22 = sshll.u32 %s0, 4
  %s23 = int_to_ptr.vmem [resolvable:$true] %s22
  %25 = dma.vmem_to_smem %s23, 16, [#allocation8], [#allocation7]
  %26 = dma.done [#allocation7], 16
  %27 = sfence
  $region1: #{tpu_custom_call.1} parent=0
    #allocation9 [shape = 'u8[65536]{0}', space=vmem, size = 0x10000, scoped, tag = 'input window, operand 12']
    #allocation10 [shape = 'u8[8192]{0}', space=vmem, size = 0x2000, scoped, tag = 'output window, operand 0, single buffered']
    #allocation11 [shape = 's32[2]{0}', space=sflag, size = 0x8, scoped, tag = 'scoped memory for tpu_custom_call.1']
    #allocation12 [shape = 'u8[2048]{0}', space=vmem, size = 0x800, scoped, tag = 'output window, operand 1, single buffered']
    #allocation13 [shape = 's32[1]{0}', space=sflag, size = 0x4, scoped, tag = 'scoped memory for tpu_custom_call.1']
    #allocation14 [shape = 'u8[2048]{0}', space=vmem, size = 0x800, scoped, tag = 'output window, operand 2, single buffered']
    %28 = vsyncpa [#allocation11], 0
    %29 = vsyncpa [#allocation13], 0
    loop: start=0, step=1, limit=4
    $region2: #{tpu_custom_call.1} parent=1 // loop_pre_header
      _
    $region3: #{tpu_custom_call.1} parent=1 // loop_header
      %s31 = sphi 0, %s35
      %p32 = scmp.ge.s32.totalorder %s31, 4
      %s39 = sphi 0, %s39
      %s41 = sphi 0, %s39
      %s42 = sphi 0, %s41
      %s56 = sphi 0, %s42
      %s60 = sphi 0, %s60
      %s62 = sphi 0, %s60
      %s63 = sphi 0, %s62
      %s77 = sphi 0, %s63
      %s81 = sphi 0, %s81
      %s83 = sphi 0, %s81
      %s84 = sphi 0, %s83
      %s98 = sphi 0, %s84
      %s102 = sphi 0, %s102
      %s104 = sphi 0, %s102
      %s105 = sphi 0, %s104
      %s119 = sphi 0, %s105
      %s123 = sphi 0, %s123
      %s125 = sphi 0, %s123
      %s126 = sphi 0, %s125
      %s140 = sphi 0, %s126
      %s144 = sphi 0, %s144
      %s146 = sphi 0, %s144
      %s147 = sphi 0, %s146
      %s161 = sphi 0, %s147
      %s165 = sphi 0, %s165
      %s167 = sphi 0, %s165
      %s168 = sphi 0, %s167
      %s182 = sphi 0, %s168
      %s186 = sphi 0, %s186
      %s188 = sphi 0, %s186
      %s189 = sphi 0, %s188
      %s203 = sphi 0, %s189
      %s207 = sphi 0, %s207
      %s209 = sphi 0, %s207
      %s210 = sphi 0, %s209
      %s224 = sphi 0, %s210
      %s228 = sphi 0, %s228
      %s230 = sphi 0, %s228
      %s231 = sphi 0, %s230
      %s245 = sphi 0, %s231
      %s251 = sphi 0, %s253
      %s254 = sphi 0, %s251
      %s255 = sphi 0, %s254
      %s271 = sphi 0, %s255
      %s275 = sphi 0, %s275
      %s277 = sphi 0, %s275
      %s278 = sphi 0, %s277
      %s292 = sphi 0, %s278
      %s296 = sphi 0, %s296
      %s298 = sphi 0, %s296
      %s299 = sphi 0, %s298
      %s313 = sphi 0, %s299
      %s317 = sphi 0, %s317
      %s319 = sphi 0, %s317
      %s320 = sphi 0, %s319
      %s334 = sphi 0, %s320
      %s338 = sphi 0, %s338
      %s340 = sphi 0, %s338
      %s341 = sphi 0, %s340
      %s355 = sphi 0, %s341
    $region4: #{tpu_custom_call.1} parent=1 // loop_header_branch
      %34 = sbr.rel (%p32) target = $region8
    $region5: #{tpu_custom_call.1} parent=1 // loop_body
      %s36 = ssub.s32 %s31, 1
      %s37 = ssub.s32 %s31, 2
      %s38 = sadd.s32 %s31, 1
      %s40 = sadd.s32 %s39, 1
      %p43 = scmp.eq.s32.totalorder %s31, 1
      %p44 = scmp.ne.s32.totalorder %s39, %s41
      %p45 = scmp.eq.s32.totalorder %s31, 0
      %p46 = por %p44, %p45
      %p47 = scmp.ne.s32.totalorder %s39, %s41
      %p48 = scmp.eq.s32.totalorder %s36, 1
      %p49 = por %p47, %p48
      %p50 = scmp.ne.s32.totalorder %s41, %s42
      %p51 = scmp.eq.s32.totalorder %s36, 0
      %p52 = por %p50, %p51
      %p53 = scmp.ne.s32.totalorder %s41, %s42
      %p54 = scmp.eq.s32.totalorder %s37, 1
      %p55 = por %p53, %p54
      %p57 = scmp.ne.s32.totalorder %s42, %s56
      %p58 = scmp.eq.s32.totalorder %s37, 0
      %p59 = por %p57, %p58
      %s61 = sadd.s32 %s60, 1
      %p64 = scmp.eq.s32.totalorder %s31, 1
      %p65 = scmp.ne.s32.totalorder %s60, %s62
      %p66 = scmp.eq.s32.totalorder %s31, 0
      %p67 = por %p65, %p66
      %p68 = scmp.ne.s32.totalorder %s60, %s62
      %p69 = scmp.eq.s32.totalorder %s36, 1
      %p70 = por %p68, %p69
      %p71 = scmp.ne.s32.totalorder %s62, %s63
      %p72 = scmp.eq.s32.totalorder %s36, 0
      %p73 = por %p71, %p72
      %p74 = scmp.ne.s32.totalorder %s62, %s63
      %p75 = scmp.eq.s32.totalorder %s37, 1
      %p76 = por %p74, %p75
      %p78 = scmp.ne.s32.totalorder %s63, %s77
      %p79 = scmp.eq.s32.totalorder %s37, 0
      %p80 = por %p78, %p79
      %s82 = sadd.s32 %s81, 1
      %p85 = scmp.eq.s32.totalorder %s31, 1
      %p86 = scmp.ne.s32.totalorder %s81, %s83
      %p87 = scmp.eq.s32.totalorder %s31, 0
      %p88 = por %p86, %p87
      %p89 = scmp.ne.s32.totalorder %s81, %s83
      %p90 = scmp.eq.s32.totalorder %s36, 1
      %p91 = por %p89, %p90
      %p92 = scmp.ne.s32.totalorder %s83, %s84
      %p93 = scmp.eq.s32.totalorder %s36, 0
      %p94 = por %p92, %p93
      %p95 = scmp.ne.s32.totalorder %s83, %s84
      %p96 = scmp.eq.s32.totalorder %s37, 1
      %p97 = por %p95, %p96
      %p99 = scmp.ne.s32.totalorder %s84, %s98
      %p100 = scmp.eq.s32.totalorder %s37, 0
      %p101 = por %p99, %p100
      %s103 = sadd.s32 %s102, 1
      %p106 = scmp.eq.s32.totalorder %s31, 1
      %p107 = scmp.ne.s32.totalorder %s102, %s104
      %p108 = scmp.eq.s32.totalorder %s31, 0
      %p109 = por %p107, %p108
      %p110 = scmp.ne.s32.totalorder %s102, %s104
      %p111 = scmp.eq.s32.totalorder %s36, 1
      %p112 = por %p110, %p111
      %p113 = scmp.ne.s32.totalorder %s104, %s105
      %p114 = scmp.eq.s32.totalorder %s36, 0
      %p115 = por %p113, %p114
      %p116 = scmp.ne.s32.totalorder %s104, %s105
      %p117 = scmp.eq.s32.totalorder %s37, 1
      %p118 = por %p116, %p117
      %p120 = scmp.ne.s32.totalorder %s105, %s119
      %p121 = scmp.eq.s32.totalorder %s37, 0
      %p122 = por %p120, %p121
      %s124 = sadd.s32 %s123, 1
      %p127 = scmp.eq.s32.totalorder %s31, 1
      %p128 = scmp.ne.s32.totalorder %s123, %s125
      %p129 = scmp.eq.s32.totalorder %s31, 0
      %p130 = por %p128, %p129
      %p131 = scmp.ne.s32.totalorder %s123, %s125
      %p132 = scmp.eq.s32.totalorder %s36, 1
      %p133 = por %p131, %p132
      %p134 = scmp.ne.s32.totalorder %s125, %s126
      %p135 = scmp.eq.s32.totalorder %s36, 0
      %p136 = por %p134, %p135
      %p137 = scmp.ne.s32.totalorder %s125, %s126
      %p138 = scmp.eq.s32.totalorder %s37, 1
      %p139 = por %p137, %p138
      %p141 = scmp.ne.s32.totalorder %s126, %s140
      %p142 = scmp.eq.s32.totalorder %s37, 0
      %p143 = por %p141, %p142
      %s145 = sadd.s32 %s144, 1
      %p148 = scmp.eq.s32.totalorder %s31, 1
      %p149 = scmp.ne.s32.totalorder %s144, %s146
      %p150 = scmp.eq.s32.totalorder %s31, 0
      %p151 = por %p149, %p150
      %p152 = scmp.ne.s32.totalorder %s144, %s146
      %p153 = scmp.eq.s32.totalorder %s36, 1
      %p154 = por %p152, %p153
      %p155 = scmp.ne.s32.totalorder %s146, %s147
      %p156 = scmp.eq.s32.totalorder %s36, 0
      %p157 = por %p155, %p156
      %p158 = scmp.ne.s32.totalorder %s146, %s147
      %p159 = scmp.eq.s32.totalorder %s37, 1
      %p160 = por %p158, %p159
      %p162 = scmp.ne.s32.totalorder %s147, %s161
      %p163 = scmp.eq.s32.totalorder %s37, 0
      %p164 = por %p162, %p163
      %s166 = sadd.s32 %s165, 1
      %p169 = scmp.eq.s32.totalorder %s31, 1
      %p170 = scmp.ne.s32.totalorder %s165, %s167
      %p171 = scmp.eq.s32.totalorder %s31, 0
      %p172 = por %p170, %p171
      %p173 = scmp.ne.s32.totalorder %s165, %s167
      %p174 = scmp.eq.s32.totalorder %s36, 1
      %p175 = por %p173, %p174
      %p176 = scmp.ne.s32.totalorder %s167, %s168
      %p177 = scmp.eq.s32.totalorder %s36, 0
      %p178 = por %p176, %p177
      %p179 = scmp.ne.s32.totalorder %s167, %s168
      %p180 = scmp.eq.s32.totalorder %s37, 1
      %p181 = por %p179, %p180
      %p183 = scmp.ne.s32.totalorder %s168, %s182
      %p184 = scmp.eq.s32.totalorder %s37, 0
      %p185 = por %p183, %p184
      %s187 = sadd.s32 %s186, 1
      %p190 = scmp.eq.s32.totalorder %s31, 1
      %p191 = scmp.ne.s32.totalorder %s186, %s188
      %p192 = scmp.eq.s32.totalorder %s31, 0
      %p193 = por %p191, %p192
      %p194 = scmp.ne.s32.totalorder %s186, %s188
      %p195 = scmp.eq.s32.totalorder %s36, 1
      %p196 = por %p194, %p195
      %p197 = scmp.ne.s32.totalorder %s188, %s189
      %p198 = scmp.eq.s32.totalorder %s36, 0
      %p199 = por %p197, %p198
      %p200 = scmp.ne.s32.totalorder %s188, %s189
      %p201 = scmp.eq.s32.totalorder %s37, 1
      %p202 = por %p200, %p201
      %p204 = scmp.ne.s32.totalorder %s189, %s203
      %p205 = scmp.eq.s32.totalorder %s37, 0
      %p206 = por %p204, %p205
      %s208 = sadd.s32 %s207, 1
      %p211 = scmp.eq.s32.totalorder %s31, 1
      %p212 = scmp.ne.s32.totalorder %s207, %s209
      %p213 = scmp.eq.s32.totalorder %s31, 0
      %p214 = por %p212, %p213
      %p215 = scmp.ne.s32.totalorder %s207, %s209
      %p216 = scmp.eq.s32.totalorder %s36, 1
      %p217 = por %p215, %p216
      %p218 = scmp.ne.s32.totalorder %s209, %s210
      %p219 = scmp.eq.s32.totalorder %s36, 0
      %p220 = por %p218, %p219
      %p221 = scmp.ne.s32.totalorder %s209, %s210
      %p222 = scmp.eq.s32.totalorder %s37, 1
      %p223 = por %p221, %p222
      %p225 = scmp.ne.s32.totalorder %s210, %s224
      %p226 = scmp.eq.s32.totalorder %s37, 0
      %p227 = por %p225, %p226
      %s229 = sadd.s32 %s228, 1
      %p232 = scmp.eq.s32.totalorder %s31, 1
      %p233 = scmp.ne.s32.totalorder %s228, %s230
      %p234 = scmp.eq.s32.totalorder %s31, 0
      %p235 = por %p233, %p234
      %p236 = scmp.ne.s32.totalorder %s228, %s230
      %p237 = scmp.eq.s32.totalorder %s36, 1
      %p238 = por %p236, %p237
      %p239 = scmp.ne.s32.totalorder %s230, %s231
      %p240 = scmp.eq.s32.totalorder %s36, 0
      %p241 = por %p239, %p240
      %p242 = scmp.ne.s32.totalorder %s230, %s231
      %p243 = scmp.eq.s32.totalorder %s37, 1
      %p244 = por %p242, %p243
      %p246 = scmp.ne.s32.totalorder %s231, %s245
      %p247 = scmp.eq.s32.totalorder %s37, 0
      %p248 = por %p246, %p247
      %s249 = ssub.s32 %s31, %s38
      %p250 = scmp.eq.s32.totalorder %s249, 0
      %s252 = sadd.s32 %s251, 1
      %s253 = scalar_select %p250, %s251, %s252
      %p256 = pneg %p250
      %p257 = scmp.eq.s32.totalorder %s31, 1
      %p258 = por %p256, %p257
      %p259 = scmp.ne.s32.totalorder %s251, %s254
      %p260 = scmp.eq.s32.totalorder %s31, 0
      %p261 = por %p259, %p260
      %p262 = scmp.ne.s32.totalorder %s251, %s254
      %p263 = scmp.eq.s32.totalorder %s36, 1
      %p264 = por %p262, %p263
      %p265 = scmp.ne.s32.totalorder %s254, %s255
      %p266 = scmp.eq.s32.totalorder %s36, 0
      %p267 = por %p265, %p266
      %p268 = scmp.ne.s32.totalorder %s254, %s255
      %p269 = scmp.eq.s32.totalorder %s37, 1
      %p270 = por %p268, %p269
      %p272 = scmp.ne.s32.totalorder %s255, %s271
      %p273 = scmp.eq.s32.totalorder %s37, 0
      %p274 = por %p272, %p273
      %s276 = sadd.s32 %s275, 1
      %p279 = scmp.eq.s32.totalorder %s31, 1
      %p280 = scmp.ne.s32.totalorder %s275, %s277
      %p281 = scmp.eq.s32.totalorder %s31, 0
      %p282 = por %p280, %p281
      %p283 = scmp.ne.s32.totalorder %s275, %s277
      %p284 = scmp.eq.s32.totalorder %s36, 1
      %p285 = por %p283, %p284
      %p286 = scmp.ne.s32.totalorder %s277, %s278
      %p287 = scmp.eq.s32.totalorder %s36, 0
      %p288 = por %p286, %p287
      %p289 = scmp.ne.s32.totalorder %s277, %s278
      %p290 = scmp.eq.s32.totalorder %s37, 1
      %p291 = por %p289, %p290
      %p293 = scmp.ne.s32.totalorder %s278, %s292
      %p294 = scmp.eq.s32.totalorder %s37, 0
      %p295 = por %p293, %p294
      %s297 = sadd.s32 %s296, 1
      %p300 = scmp.eq.s32.totalorder %s31, 1
      %p301 = scmp.ne.s32.totalorder %s296, %s298
      %p302 = scmp.eq.s32.totalorder %s31, 0
      %p303 = por %p301, %p302
      %p304 = scmp.ne.s32.totalorder %s296, %s298
      %p305 = scmp.eq.s32.totalorder %s36, 1
      %p306 = por %p304, %p305
      %p307 = scmp.ne.s32.totalorder %s298, %s299
      %p308 = scmp.eq.s32.totalorder %s36, 0
      %p309 = por %p307, %p308
      %p310 = scmp.ne.s32.totalorder %s298, %s299
      %p311 = scmp.eq.s32.totalorder %s37, 1
      %p312 = por %p310, %p311
      %p314 = scmp.ne.s32.totalorder %s299, %s313
      %p315 = scmp.eq.s32.totalorder %s37, 0
      %p316 = por %p314, %p315
      %s318 = sadd.s32 %s317, 1
      %p321 = scmp.eq.s32.totalorder %s31, 1
      %p322 = scmp.ne.s32.totalorder %s317, %s319
      %p323 = scmp.eq.s32.totalorder %s31, 0
      %p324 = por %p322, %p323
      %p325 = scmp.ne.s32.totalorder %s317, %s319
      %p326 = scmp.eq.s32.totalorder %s36, 1
      %p327 = por %p325, %p326
      %p328 = scmp.ne.s32.totalorder %s319, %s320
      %p329 = scmp.eq.s32.totalorder %s36, 0
      %p330 = por %p328, %p329
      %p331 = scmp.ne.s32.totalorder %s319, %s320
      %p332 = scmp.eq.s32.totalorder %s37, 1
      %p333 = por %p331, %p332
      %p335 = scmp.ne.s32.totalorder %s320, %s334
      %p336 = scmp.eq.s32.totalorder %s37, 0
      %p337 = por %p335, %p336
      %s339 = sadd.s32 %s338, 1
      %p342 = scmp.eq.s32.totalorder %s31, 1
      %p343 = scmp.ne.s32.totalorder %s338, %s340
      %p344 = scmp.eq.s32.totalorder %s31, 0
      %p345 = por %p343, %p344
      %p346 = scmp.ne.s32.totalorder %s338, %s340
      %p347 = scmp.eq.s32.totalorder %s36, 1
      %p348 = por %p346, %p347
      %p349 = scmp.ne.s32.totalorder %s340, %s341
      %p350 = scmp.eq.s32.totalorder %s36, 0
      %p351 = por %p349, %p350
      %p352 = scmp.ne.s32.totalorder %s340, %s341
      %p353 = scmp.eq.s32.totalorder %s37, 1
      %p354 = por %p352, %p353
      %p356 = scmp.ne.s32.totalorder %s341, %s355
      %p357 = scmp.eq.s32.totalorder %s37, 0
      %p358 = por %p356, %p357
      %p359 = scmp.le.s32.totalorder 1, %s31
      %p360 = scmp.lt.s32.totalorder %s31, 3
      %p361 = pnand %p359, %p360
      %p362 = pneg %p361
      // Predicated region
      $region9: #{tpu_custom_call.1} parent=5 // pred_check
        _
      $region10: #{tpu_custom_call.1} parent=5 // pred_check_branch
        %364 = sbr.rel (%p361) target = $region12
      $region11: #{tpu_custom_call.1} parent=5 // pred_region
        %s365 = ssub.s32 %s31, 1
        // Predicated region
        $region13: #{tpu_custom_call.1} parent=11 // pred_check
          %p366 = pneg %p52
        $region14: #{tpu_custom_call.1} parent=11 // pred_check_branch
          %368 = sbr.rel (%p366) target = $region16
        $region15: #{tpu_custom_call.1} parent=11 // pred_region
          _
        $region16: #{tpu_custom_call.1} parent=11 // pred_fallthru
          _
        // Predicated region
        $region17: #{tpu_custom_call.1} parent=11 // pred_check
          %p369 = pneg %p73
        $region18: #{tpu_custom_call.1} parent=11 // pred_check_branch
          %371 = sbr.rel (%p369) target = $region20
        $region19: #{tpu_custom_call.1} parent=11 // pred_region
          _
        $region20: #{tpu_custom_call.1} parent=11 // pred_fallthru
          _
        // Predicated region
        $region21: #{tpu_custom_call.1} parent=11 // pred_check
          %p372 = pneg %p94
        $region22: #{tpu_custom_call.1} parent=11 // pred_check_branch
          %374 = sbr.rel (%p372) target = $region24
        $region23: #{tpu_custom_call.1} parent=11 // pred_region
          _
        $region24: #{tpu_custom_call.1} parent=11 // pred_fallthru
          _
        // Predicated region
        $region25: #{tpu_custom_call.1} parent=11 // pred_check
          %p375 = pneg %p115
        $region26: #{tpu_custom_call.1} parent=11 // pred_check_branch
          %377 = sbr.rel (%p375) target = $region28
        $region27: #{tpu_custom_call.1} parent=11 // pred_region
          _
        $region28: #{tpu_custom_call.1} parent=11 // pred_fallthru
          _
        // Predicated region
        $region29: #{tpu_custom_call.1} parent=11 // pred_check
          %p378 = pneg %p136
        $region30: #{tpu_custom_call.1} parent=11 // pred_check_branch
          %380 = sbr.rel (%p378) target = $region32
        $region31: #{tpu_custom_call.1} parent=11 // pred_region
          _
        $region32: #{tpu_custom_call.1} parent=11 // pred_fallthru
          _
        // Predicated region
        $region33: #{tpu_custom_call.1} parent=11 // pred_check
          %p381 = pneg %p157
        $region34: #{tpu_custom_call.1} parent=11 // pred_check_branch
          %383 = sbr.rel (%p381) target = $region36
        $region35: #{tpu_custom_call.1} parent=11 // pred_region
          _
        $region36: #{tpu_custom_call.1} parent=11 // pred_fallthru
          _
        // Predicated region
        $region37: #{tpu_custom_call.1} parent=11 // pred_check
          %p384 = pneg %p178
        $region38: #{tpu_custom_call.1} parent=11 // pred_check_branch
          %386 = sbr.rel (%p384) target = $region40
        $region39: #{tpu_custom_call.1} parent=11 // pred_region
          _
        $region40: #{tpu_custom_call.1} parent=11 // pred_fallthru
          _
        // Predicated region
        $region41: #{tpu_custom_call.1} parent=11 // pred_check
          %p387 = pneg %p199
        $region42: #{tpu_custom_call.1} parent=11 // pred_check_branch
          %389 = sbr.rel (%p387) target = $region44
        $region43: #{tpu_custom_call.1} parent=11 // pred_region
          _
        $region44: #{tpu_custom_call.1} parent=11 // pred_fallthru
          _
        // Predicated region
        $region45: #{tpu_custom_call.1} parent=11 // pred_check
          %p390 = pneg %p220
        $region46: #{tpu_custom_call.1} parent=11 // pred_check_branch
          %392 = sbr.rel (%p390) target = $region48
        $region47: #{tpu_custom_call.1} parent=11 // pred_region
          _
        $region48: #{tpu_custom_call.1} parent=11 // pred_fallthru
          _
        // Predicated region
        $region49: #{tpu_custom_call.1} parent=11 // pred_check
          %p393 = pneg %p241
        $region50: #{tpu_custom_call.1} parent=11 // pred_check_branch
          %395 = sbr.rel (%p393) target = $region52
        $region51: #{tpu_custom_call.1} parent=11 // pred_region
          _
        $region52: #{tpu_custom_call.1} parent=11 // pred_fallthru
          _
        // Predicated region
        $region53: #{tpu_custom_call.1} parent=11 // pred_check
          %p396 = pneg %p288
        $region54: #{tpu_custom_call.1} parent=11 // pred_check_branch
          %398 = sbr.rel (%p396) target = $region56
        $region55: #{tpu_custom_call.1} parent=11 // pred_region
          _
        $region56: #{tpu_custom_call.1} parent=11 // pred_fallthru
          _
      $region12: #{tpu_custom_call.1} parent=5 // pred_fallthru
        _
      %p399 = scmp.lt.s32.totalorder %s31, 2
      // Predicated region
      $region57: #{tpu_custom_call.1} parent=5 // pred_check
        %p400 = pneg %p399
      $region58: #{tpu_custom_call.1} parent=5 // pred_check_branch
        %402 = sbr.rel (%p400) target = $region60
      $region59: #{tpu_custom_call.1} parent=5 // pred_region
        // Predicated region
        $region61: #{tpu_custom_call.1} parent=59 // pred_check
          %p403 = pneg %p261
        $region62: #{tpu_custom_call.1} parent=59 // pred_check_branch
          %405 = sbr.rel (%p403) target = $region64
        $region63: #{tpu_custom_call.1} parent=59 // pred_region
          %s406 = sand.u32 %s251, 1
          %s407 = sand.u32 %s251, 1
          %s408 = smul.addr %s407, 64
          %s409 = scalar_lea.vmem [#allocation9], %s408
          %s410 = smul.u32 2, %s31
          %s411 = smul.addr %s410, 4
          %s412 = scalar_lea.vmem %s12, %s411
          // Predicated region
          $region65: #{tpu_custom_call.1} parent=63 // pred_check
            _
          $region66: #{tpu_custom_call.1} parent=63 // pred_check_branch
            %414 = sbr.rel (0) target = $region68
          $region67: #{tpu_custom_call.1} parent=63 // pred_region
            // Predicated region
            $region69: #{tpu_custom_call.1} parent=67 // pred_check
              _
            $region70: #{tpu_custom_call.1} parent=67 // pred_check_branch
              %416 = sbr.rel (0) target = $region72
            $region71: #{tpu_custom_call.1} parent=67 // pred_region
              // Predicated region
              $region84: #{tpu_custom_call.1} parent=71 // pred_check
                _
              $region85: #{tpu_custom_call.1} parent=71 // pred_check_branch
                %445 = sbr.rel (0) target = $region87
              $region86: #{tpu_custom_call.1} parent=71 // pred_region
                loop: start=0, step=1, limit=1
                $region88: #{tpu_custom_call.1} parent=86 // loop_pre_header
                  _
                $region89: #{tpu_custom_call.1} parent=86 // loop_header
                  %s447 = sphi 0, %s451
                  %p448 = scmp.ge.s32.totalorder %s447, 1
                  %s452 = sphi %s412, %s412
                  %s453 = sphi %s409, %s409
                $region90: #{tpu_custom_call.1} parent=86 // loop_header_branch
                  %450 = sbr.rel (%p448) target = $region94
                $region91: #{tpu_custom_call.1} parent=86 // loop_body
                  %v454 = vld [vmem:[%s452] sm:$0xff]
                  %455 = vst [vmem:[%s453] sm:$0xff] %v454
                  %v456 = vld [vmem:[%s452 + $0x10] sm:$0xff]
                  %457 = vst [vmem:[%s453 + $0x8] sm:$0xff] %v456
                  %v458 = vld [vmem:[%s452 + $0x20] sm:$0xff]
                  %459 = vst [vmem:[%s453 + $0x10] sm:$0xff] %v458
                  %v460 = vld [vmem:[%s452 + $0x30] sm:$0xff]
                  %461 = vst [vmem:[%s453 + $0x18] sm:$0xff] %v460
                  %v462 = vld [vmem:[%s452 + $0x40] sm:$0xff]
                  %463 = vst [vmem:[%s453 + $0x20] sm:$0xff] %v462
                  %v464 = vld [vmem:[%s452 + $0x50] sm:$0xff]
                  %465 = vst [vmem:[%s453 + $0x28] sm:$0xff] %v464
                  %v466 = vld [vmem:[%s452 + $0x60] sm:$0xff]
                  %467 = vst [vmem:[%s453 + $0x30] sm:$0xff] %v466
                  %v468 = vld [vmem:[%s452 + $0x70] sm:$0xff]
                  %469 = vst [vmem:[%s453 + $0x38] sm:$0xff] %v468
                $region92: #{tpu_custom_call.1} parent=86 // loop_footer
                  %s451 = sadd.s32 1, %s447
                $region93: #{tpu_custom_call.1} parent=86 // loop_footer_branch
                  %446 = sbr.rel target = $region89
                $region94: #{tpu_custom_call.1} parent=86 // loop_exit
                  _
              $region87: #{tpu_custom_call.1} parent=71 // pred_fallthru
                _
              // Predicated region
              $region95: #{tpu_custom_call.1} parent=71 // pred_check
                _
              $region96: #{tpu_custom_call.1} parent=71 // pred_check_branch
                %471 = sbr.rel target = $region98
              $region97: #{tpu_custom_call.1} parent=71 // pred_region
                _
              $region98: #{tpu_custom_call.1} parent=71 // pred_fallthru
                _
            $region72: #{tpu_custom_call.1} parent=67 // pred_fallthru
              _
            // Predicated region
            $region73: #{tpu_custom_call.1} parent=67 // pred_check
              _
            $region74: #{tpu_custom_call.1} parent=67 // pred_check_branch
              %418 = sbr.rel target = $region76
            $region75: #{tpu_custom_call.1} parent=67 // pred_region
              loop: start=0, step=1, limit=1
              $region77: #{tpu_custom_call.1} parent=75 // loop_pre_header
                _
              $region78: #{tpu_custom_call.1} parent=75 // loop_header
                %s421 = sphi 0, %s425
                %p422 = scmp.ge.s32.totalorder %s421, 1
                %s426 = sphi %s412, %s412
                %s427 = sphi %s409, %s409
              $region79: #{tpu_custom_call.1} parent=75 // loop_header_branch
                %424 = sbr.rel (%p422) target = $region83
              $region80: #{tpu_custom_call.1} parent=75 // loop_body
                %v428 = vld [vmem:[%s426] sm:$0xff]
                %429 = vst [vmem:[%s427] sm:$0xff] %v428
                %v430 = vld [vmem:[%s426 + $0x10] sm:$0xff]
                %431 = vst [vmem:[%s427 + $0x8] sm:$0xff] %v430
                %v432 = vld [vmem:[%s426 + $0x20] sm:$0xff]
                %433 = vst [vmem:[%s427 + $0x10] sm:$0xff] %v432
                %v434 = vld [vmem:[%s426 + $0x30] sm:$0xff]
                %435 = vst [vmem:[%s427 + $0x18] sm:$0xff] %v434
                %v436 = vld [vmem:[%s426 + $0x40] sm:$0xff]
                %437 = vst [vmem:[%s427 + $0x20] sm:$0xff] %v436
                %v438 = vld [vmem:[%s426 + $0x50] sm:$0xff]
                %439 = vst [vmem:[%s427 + $0x28] sm:$0xff] %v438
                %v440 = vld [vmem:[%s426 + $0x60] sm:$0xff]
                %441 = vst [vmem:[%s427 + $0x30] sm:$0xff] %v440
                %v442 = vld [vmem:[%s426 + $0x70] sm:$0xff]
                %443 = vst [vmem:[%s427 + $0x38] sm:$0xff] %v442
              $region81: #{tpu_custom_call.1} parent=75 // loop_footer
                %s425 = sadd.s32 1, %s421
              $region82: #{tpu_custom_call.1} parent=75 // loop_footer_branch
                %420 = sbr.rel target = $region78
              $region83: #{tpu_custom_call.1} parent=75 // loop_exit
                _
            $region76: #{tpu_custom_call.1} parent=67 // pred_fallthru
              _
          $region68: #{tpu_custom_call.1} parent=63 // pred_fallthru
            _
          %472 = vnop
        $region64: #{tpu_custom_call.1} parent=59 // pred_fallthru
          _
      $region60: #{tpu_custom_call.1} parent=5 // pred_fallthru
        _
      %p473 = scmp.le.s32.totalorder 1, %s31
      %p474 = scmp.lt.s32.totalorder %s31, 3
      %p475 = pnand %p473, %p474
      %p476 = pneg %p475
      // Predicated region
      $region99: #{tpu_custom_call.1} parent=5 // pred_check
        _
      $region100: #{tpu_custom_call.1} parent=5 // pred_check_branch
        %478 = sbr.rel (%p475) target = $region102
      $region101: #{tpu_custom_call.1} parent=5 // pred_region
        %s479 = ssub.s32 %s31, 1
        %s480 = sand.u32 %s254, 1
        %s481 = sand.u32 %s254, 1
        %s482 = smul.addr %s481, 64
        %s483 = scalar_lea.vmem [#allocation9], %s482
        // Predicated region
        $region103: #{tpu_custom_call.1} parent=101 // pred_check
          %p484 = pneg %p267
        $region104: #{tpu_custom_call.1} parent=101 // pred_check_branch
          %486 = sbr.rel (%p484) target = $region106
        $region105: #{tpu_custom_call.1} parent=101 // pred_region
          _
        $region106: #{tpu_custom_call.1} parent=101 // pred_fallthru
          _
        %p487 = pneg %p52
        %p488 = pneg %p49
        %p489 = pneg %p73
        %p490 = pneg %p70
        %p491 = pneg %p94
        %p492 = pneg %p91
        %p493 = pneg %p115
        %p494 = pneg %p112
        %p495 = pneg %p136
        %p496 = pneg %p133
        %p497 = pneg %p157
        %p498 = pneg %p154
        %p499 = pneg %p178
        %p500 = pneg %p175
        %p501 = pneg %p199
        %p502 = pneg %p196
        %p503 = pneg %p220
        %p504 = pneg %p217
        %p505 = pneg %p241
        %p506 = pneg %p238
        %s507 = sand.u32 %s254, 1
        %s508 = sand.u32 %s254, 1
        %s509 = smul.addr %s508, 64
        %s510 = scalar_lea.vmem [#allocation9], %s509
        %p511 = pneg %p267
        %p512 = pneg %p264
        %p513 = pneg %p288
        %p514 = pneg %p285
        %p515 = pneg %p309
        %p516 = pneg %p306
        %p517 = pneg %p330
        %p518 = pneg %p327
        %p519 = pneg %p351
        %p520 = pneg %p348
        %s521 = smul.u32 2, %s36
        %p523 = scmp.eq.s32.totalorder %s36, 0
        // Predicated region
        $region107: #{tpu_custom_call.1} parent=101 // pred_check
          %p524 = pneg %p523
        $region108: #{tpu_custom_call.1} parent=101 // pred_check_branch
          %526 = sbr.rel (%p524) target = $region110
        $region109: #{tpu_custom_call.1} parent=101 // pred_region
          %vm527 = vcmask 3072
          %528 = vst.msk [vmem:[#allocation5] sm:$0xf] %vm527, -inf
          %529 = vst.msk [vmem:[#allocation6] sm:$0xf] %vm527, 0.0
          %s530 = sld [smem:[#allocation8]]
          %s531 = sld [smem:[#allocation8 + $0x1]]
          %s532 = sld [smem:[#allocation8 + $0x2]]
          %s533 = sld [smem:[#allocation8 + $0x3]]
          %s534 = scalar_lea.vmem %s1, %s530
          %p536 = scmp.lt.u32.totalorder 1, 8
          %p537 = pneg %p536
          // Predicated region
          $region111: #{tpu_custom_call.1} parent=109 // pred_check
            _
          $region112: #{tpu_custom_call.1} parent=109 // pred_check_branch
            %539 = sbr.rel (%p536) target = $region114
          $region113: #{tpu_custom_call.1} parent=109 // pred_region
            %s554 = sand.u32 1, 7
            %p555 = scmp.eq.s32.totalorder %s554, 0
            %p556 = pneg %p555
            // Predicated region
            $region126: #{tpu_custom_call.1} parent=113 // pred_check
              _
            $region127: #{tpu_custom_call.1} parent=113 // pred_check_branch
              %558 = sbr.rel (%p555) target = $region129
            $region128: #{tpu_custom_call.1} parent=113 // pred_region
              %s559 = sand.u32 1, 7
              %s560 = ssub.s32 1, %s559
              %s561 = scalar_lea.vmem %s534, %s560
              %s562 = ssub.s32 1, %s559
              %s563 = scalar_lea.vmem [#allocation2], %s562
              %s564 = sshllo.u32 0, %s559
              loop: start=0, step=1, limit=1
              $region130: #{tpu_custom_call.1} parent=128 // loop_pre_header
                _
              $region131: #{tpu_custom_call.1} parent=128 // loop_header
                %s566 = sphi 0, %s570
                %p567 = scmp.ge.s32.totalorder %s566, 1
                %s571 = sphi %s561, %s561
                %s572 = sphi %s563, %s563
              $region132: #{tpu_custom_call.1} parent=128 // loop_header_branch
                %569 = sbr.rel (%p567) target = $region136
              $region133: #{tpu_custom_call.1} parent=128 // loop_body
                %v573 = vld [vmem:[%s571] sm:%s564]
                %574 = vst [vmem:[%s572] sm:%s564] %v573
              $region134: #{tpu_custom_call.1} parent=128 // loop_footer
                %s570 = sadd.s32 1, %s566
              $region135: #{tpu_custom_call.1} parent=128 // loop_footer_branch
                %565 = sbr.rel target = $region131
              $region136: #{tpu_custom_call.1} parent=128 // loop_exit
                _
            $region129: #{tpu_custom_call.1} parent=113 // pred_fallthru
              _
          $region114: #{tpu_custom_call.1} parent=109 // pred_fallthru
            _
          // Predicated region
          $region115: #{tpu_custom_call.1} parent=109 // pred_check
            %p540 = pneg %p536
          $region116: #{tpu_custom_call.1} parent=109 // pred_check_branch
            %542 = sbr.rel (%p540) target = $region118
          $region117: #{tpu_custom_call.1} parent=109 // pred_region
            %s543 = sshllo.u32 0, 1
            loop: start=0, step=1, limit=1
            $region119: #{tpu_custom_call.1} parent=117 // loop_pre_header
              _
            $region120: #{tpu_custom_call.1} parent=117 // loop_header
              %s545 = sphi 0, %s549
              %p546 = scmp.ge.s32.totalorder %s545, 1
              %s550 = sphi %s534, %s534
              %s551 = sphi [#allocation2], [#allocation2]
            $region121: #{tpu_custom_call.1} parent=117 // loop_header_branch
              %548 = sbr.rel (%p546) target = $region125
            $region122: #{tpu_custom_call.1} parent=117 // loop_body
              %v552 = vld [vmem:[%s550] sm:%s543]
              %553 = vst [vmem:[%s551] sm:%s543] %v552
            $region123: #{tpu_custom_call.1} parent=117 // loop_footer
              %s549 = sadd.s32 1, %s545
            $region124: #{tpu_custom_call.1} parent=117 // loop_footer_branch
              %544 = sbr.rel target = $region120
            $region125: #{tpu_custom_call.1} parent=117 // loop_exit
              _
          $region118: #{tpu_custom_call.1} parent=109 // pred_fallthru
            _
          // Predicated region
          $region137: #{tpu_custom_call.1} parent=109 // pred_check
            _
          $region138: #{tpu_custom_call.1} parent=109 // pred_check_branch
            %577 = sbr.rel (0) target = $region140
          $region139: #{tpu_custom_call.1} parent=109 // pred_region
            %578 = vsyncadd [#allocation3], 16
          $region140: #{tpu_custom_call.1} parent=109 // pred_fallthru
            _
          %s579 = scalar_lea.vmem %s1, %s531
          %s580 = scalar_lea.vmem [#allocation2], 1
          %s581 = scalar_lea.sflag [#allocation3], 1
          %p583 = scmp.lt.u32.totalorder 1, 8
          %p584 = pneg %p583
          // Predicated region
          $region141: #{tpu_custom_call.1} parent=109 // pred_check
            _
          $region142: #{tpu_custom_call.1} parent=109 // pred_check_branch
            %586 = sbr.rel (%p583) target = $region144
          $region143: #{tpu_custom_call.1} parent=109 // pred_region
            %s601 = sand.u32 1, 7
            %p602 = scmp.eq.s32.totalorder %s601, 0
            %p603 = pneg %p602
            // Predicated region
            $region156: #{tpu_custom_call.1} parent=143 // pred_check
              _
            $region157: #{tpu_custom_call.1} parent=143 // pred_check_branch
              %605 = sbr.rel (%p602) target = $region159
            $region158: #{tpu_custom_call.1} parent=143 // pred_region
              %s606 = sand.u32 1, 7
              %s607 = ssub.s32 1, %s606
              %s608 = scalar_lea.vmem %s579, %s607
              %s609 = ssub.s32 1, %s606
              %s610 = scalar_lea.vmem %s580, %s609 [#allocation2]
              %s611 = sshllo.u32 0, %s606
              loop: start=0, step=1, limit=1
              $region160: #{tpu_custom_call.1} parent=158 // loop_pre_header
                _
              $region161: #{tpu_custom_call.1} parent=158 // loop_header
                %s613 = sphi 0, %s617
                %p614 = scmp.ge.s32.totalorder %s613, 1
                %s618 = sphi %s608, %s608
                %s619 = sphi %s610, %s610
              $region162: #{tpu_custom_call.1} parent=158 // loop_header_branch
                %616 = sbr.rel (%p614) target = $region166
              $region163: #{tpu_custom_call.1} parent=158 // loop_body
                %v620 = vld [vmem:[%s618] sm:%s611]
                %621 = vst [vmem:[%s619] sm:%s611] %v620
              $region164: #{tpu_custom_call.1} parent=158 // loop_footer
                %s617 = sadd.s32 1, %s613
              $region165: #{tpu_custom_call.1} parent=158 // loop_footer_branch
                %612 = sbr.rel target = $region161
              $region166: #{tpu_custom_call.1} parent=158 // loop_exit
                _
            $region159: #{tpu_custom_call.1} parent=143 // pred_fallthru
              _
          $region144: #{tpu_custom_call.1} parent=109 // pred_fallthru
            _
          // Predicated region
          $region145: #{tpu_custom_call.1} parent=109 // pred_check
            %p587 = pneg %p583
          $region146: #{tpu_custom_call.1} parent=109 // pred_check_branch
            %589 = sbr.rel (%p587) target = $region148
          $region147: #{tpu_custom_call.1} parent=109 // pred_region
            %s590 = sshllo.u32 0, 1
            loop: start=0, step=1, limit=1
            $region149: #{tpu_custom_call.1} parent=147 // loop_pre_header
              _
            $region150: #{tpu_custom_call.1} parent=147 // loop_header
              %s592 = sphi 0, %s596
              %p593 = scmp.ge.s32.totalorder %s592, 1
              %s597 = sphi %s579, %s579
              %s598 = sphi %s580, %s580
            $region151: #{tpu_custom_call.1} parent=147 // loop_header_branch
              %595 = sbr.rel (%p593) target = $region155
            $region152: #{tpu_custom_call.1} parent=147 // loop_body
              %v599 = vld [vmem:[%s597] sm:%s590]
              %600 = vst [vmem:[%s598] sm:%s590] %v599
            $region153: #{tpu_custom_call.1} parent=147 // loop_footer
              %s596 = sadd.s32 1, %s592
            $region154: #{tpu_custom_call.1} parent=147 // loop_footer_branch
              %591 = sbr.rel target = $region150
            $region155: #{tpu_custom_call.1} parent=147 // loop_exit
              _
          $region148: #{tpu_custom_call.1} parent=109 // pred_fallthru
            _
          // Predicated region
          $region167: #{tpu_custom_call.1} parent=109 // pred_check
            _
          $region168: #{tpu_custom_call.1} parent=109 // pred_check_branch
            %624 = sbr.rel (0) target = $region170
          $region169: #{tpu_custom_call.1} parent=109 // pred_region
            %625 = vsyncadd %s581, 16
          $region170: #{tpu_custom_call.1} parent=109 // pred_fallthru
            _
          %s626 = scalar_lea.vmem %s1, %s532
          %s627 = scalar_lea.vmem [#allocation2], 2
          %s628 = scalar_lea.sflag [#allocation3], 2
          %p630 = scmp.lt.u32.totalorder 1, 8
          %p631 = pneg %p630
          // Predicated region
          $region171: #{tpu_custom_call.1} parent=109 // pred_check
            _
          $region172: #{tpu_custom_call.1} parent=109 // pred_check_branch
            %633 = sbr.rel (%p630) target = $region174
          $region173: #{tpu_custom_call.1} parent=109 // pred_region
            %s648 = sand.u32 1, 7
            %p649 = scmp.eq.s32.totalorder %s648, 0
            %p650 = pneg %p649
            // Predicated region
            $region186: #{tpu_custom_call.1} parent=173 // pred_check
              _
            $region187: #{tpu_custom_call.1} parent=173 // pred_check_branch
              %652 = sbr.rel (%p649) target = $region189
            $region188: #{tpu_custom_call.1} parent=173 // pred_region
              %s653 = sand.u32 1, 7
              %s654 = ssub.s32 1, %s653
              %s655 = scalar_lea.vmem %s626, %s654
              %s656 = ssub.s32 1, %s653
              %s657 = scalar_lea.vmem %s627, %s656 [#allocation2]
              %s658 = sshllo.u32 0, %s653
              loop: start=0, step=1, limit=1
              $region190: #{tpu_custom_call.1} parent=188 // loop_pre_header
                _
              $region191: #{tpu_custom_call.1} parent=188 // loop_header
                %s660 = sphi 0, %s664
                %p661 = scmp.ge.s32.totalorder %s660, 1
                %s665 = sphi %s655, %s655
                %s666 = sphi %s657, %s657
              $region192: #{tpu_custom_call.1} parent=188 // loop_header_branch
                %663 = sbr.rel (%p661) target = $region196
              $region193: #{tpu_custom_call.1} parent=188 // loop_body
                %v667 = vld [vmem:[%s665] sm:%s658]
                %668 = vst [vmem:[%s666] sm:%s658] %v667
              $region194: #{tpu_custom_call.1} parent=188 // loop_footer
                %s664 = sadd.s32 1, %s660
              $region195: #{tpu_custom_call.1} parent=188 // loop_footer_branch
                %659 = sbr.rel target = $region191
              $region196: #{tpu_custom_call.1} parent=188 // loop_exit
                _
            $region189: #{tpu_custom_call.1} parent=173 // pred_fallthru
              _
          $region174: #{tpu_custom_call.1} parent=109 // pred_fallthru
            _
          // Predicated region
          $region175: #{tpu_custom_call.1} parent=109 // pred_check
            %p634 = pneg %p630
          $region176: #{tpu_custom_call.1} parent=109 // pred_check_branch
            %636 = sbr.rel (%p634) target = $region178
          $region177: #{tpu_custom_call.1} parent=109 // pred_region
            %s637 = sshllo.u32 0, 1
            loop: start=0, step=1, limit=1
            $region179: #{tpu_custom_call.1} parent=177 // loop_pre_header
              _
            $region180: #{tpu_custom_call.1} parent=177 // loop_header
              %s639 = sphi 0, %s643
              %p640 = scmp.ge.s32.totalorder %s639, 1
              %s644 = sphi %s626, %s626
              %s645 = sphi %s627, %s627
            $region181: #{tpu_custom_call.1} parent=177 // loop_header_branch
              %642 = sbr.rel (%p640) target = $region185
            $region182: #{tpu_custom_call.1} parent=177 // loop_body
              %v646 = vld [vmem:[%s644] sm:%s637]
              %647 = vst [vmem:[%s645] sm:%s637] %v646
            $region183: #{tpu_custom_call.1} parent=177 // loop_footer
              %s643 = sadd.s32 1, %s639
            $region184: #{tpu_custom_call.1} parent=177 // loop_footer_branch
              %638 = sbr.rel target = $region180
            $region185: #{tpu_custom_call.1} parent=177 // loop_exit
              _
          $region178: #{tpu_custom_call.1} parent=109 // pred_fallthru
            _
          // Predicated region
          $region197: #{tpu_custom_call.1} parent=109 // pred_check
            _
          $region198: #{tpu_custom_call.1} parent=109 // pred_check_branch
            %671 = sbr.rel (0) target = $region200
          $region199: #{tpu_custom_call.1} parent=109 // pred_region
            %672 = vsyncadd %s628, 16
          $region200: #{tpu_custom_call.1} parent=109 // pred_fallthru
            _
          %s673 = scalar_lea.vmem %s1, %s533
          %s674 = scalar_lea.vmem [#allocation2], 3
          %s675 = scalar_lea.sflag [#allocation3], 3
          %p677 = scmp.lt.u32.totalorder 1, 8
          %p678 = pneg %p677
          // Predicated region
          $region201: #{tpu_custom_call.1} parent=109 // pred_check
            _
          $region202: #{tpu_custom_call.1} parent=109 // pred_check_branch
            %680 = sbr.rel (%p677) target = $region204
          $region203: #{tpu_custom_call.1} parent=109 // pred_region
            %s695 = sand.u32 1, 7
            %p696 = scmp.eq.s32.totalorder %s695, 0
            %p697 = pneg %p696
            // Predicated region
            $region216: #{tpu_custom_call.1} parent=203 // pred_check
              _
            $region217: #{tpu_custom_call.1} parent=203 // pred_check_branch
              %699 = sbr.rel (%p696) target = $region219
            $region218: #{tpu_custom_call.1} parent=203 // pred_region
              %s700 = sand.u32 1, 7
              %s701 = ssub.s32 1, %s700
              %s702 = scalar_lea.vmem %s673, %s701
              %s703 = ssub.s32 1, %s700
              %s704 = scalar_lea.vmem %s674, %s703 [#allocation2]
              %s705 = sshllo.u32 0, %s700
              loop: start=0, step=1, limit=1
              $region220: #{tpu_custom_call.1} parent=218 // loop_pre_header
                _
              $region221: #{tpu_custom_call.1} parent=218 // loop_header
                %s707 = sphi 0, %s711
                %p708 = scmp.ge.s32.totalorder %s707, 1
                %s712 = sphi %s702, %s702
                %s713 = sphi %s704, %s704
              $region222: #{tpu_custom_call.1} parent=218 // loop_header_branch
                %710 = sbr.rel (%p708) target = $region226
              $region223: #{tpu_custom_call.1} parent=218 // loop_body
                %v714 = vld [vmem:[%s712] sm:%s705]
                %715 = vst [vmem:[%s713] sm:%s705] %v714
              $region224: #{tpu_custom_call.1} parent=218 // loop_footer
                %s711 = sadd.s32 1, %s707
              $region225: #{tpu_custom_call.1} parent=218 // loop_footer_branch
                %706 = sbr.rel target = $region221
              $region226: #{tpu_custom_call.1} parent=218 // loop_exit
                _
            $region219: #{tpu_custom_call.1} parent=203 // pred_fallthru
              _
          $region204: #{tpu_custom_call.1} parent=109 // pred_fallthru
            _
          // Predicated region
          $region205: #{tpu_custom_call.1} parent=109 // pred_check
            %p681 = pneg %p677
          $region206: #{tpu_custom_call.1} parent=109 // pred_check_branch
            %683 = sbr.rel (%p681) target = $region208
          $region207: #{tpu_custom_call.1} parent=109 // pred_region
            %s684 = sshllo.u32 0, 1
            loop: start=0, step=1, limit=1
            $region209: #{tpu_custom_call.1} parent=207 // loop_pre_header
              _
            $region210: #{tpu_custom_call.1} parent=207 // loop_header
              %s686 = sphi 0, %s690
              %p687 = scmp.ge.s32.totalorder %s686, 1
              %s691 = sphi %s673, %s673
              %s692 = sphi %s674, %s674
            $region211: #{tpu_custom_call.1} parent=207 // loop_header_branch
              %689 = sbr.rel (%p687) target = $region215
            $region212: #{tpu_custom_call.1} parent=207 // loop_body
              %v693 = vld [vmem:[%s691] sm:%s684]
              %694 = vst [vmem:[%s692] sm:%s684] %v693
            $region213: #{tpu_custom_call.1} parent=207 // loop_footer
              %s690 = sadd.s32 1, %s686
            $region214: #{tpu_custom_call.1} parent=207 // loop_footer_branch
              %685 = sbr.rel target = $region210
            $region215: #{tpu_custom_call.1} parent=207 // loop_exit
              _
          $region208: #{tpu_custom_call.1} parent=109 // pred_fallthru
            _
          // Predicated region
          $region227: #{tpu_custom_call.1} parent=109 // pred_check
            _
          $region228: #{tpu_custom_call.1} parent=109 // pred_check_branch
            %718 = sbr.rel (0) target = $region230
          $region229: #{tpu_custom_call.1} parent=109 // pred_region
            %719 = vsyncadd %s675, 16
          $region230: #{tpu_custom_call.1} parent=109 // pred_fallthru
            _
          %v720 = vld [vmem:[%s2] sm:$0xf]
          %v721 = vld [vmem:[%s3] sm:$0xff]
          %v722 = vld [vmem:[%s3 + $0x8] sm:$0xff]
          %v723 = vld [vmem:[%s3 + $0x10] sm:$0xff]
          %v724 = vld [vmem:[%s3 + $0x18] sm:$0xff]
          %v725 = vld [vmem:[%s4] sm:$0xff]
          %v726 = vld [vmem:[%s4 + $0x8] sm:$0xff]
          %v727 = vld [vmem:[%s4 + $0x10] sm:$0xff]
          %v728 = vld [vmem:[%s4 + $0x18] sm:$0xff]
          %vm729 = vcmask 261120
          %v731 = vsel %vm729, %v720, 0
          %733 = vmatprep.subr.mxu0 0.0
          %734 = vmatpush1.msra.mxu0 %v725
          %735 = vmatprep.subr.mxu0 0.0
          %736 = vmatpush1.msra.mxu0 %v726
          %737 = vmatprep.subr.mxu0 0.0
          %738 = vmatpush1.msra.mxu0 %v727
          %739 = vmatprep.subr.mxu0 0.0
          %740 = vmatpush1.msra.mxu0 %v728
          %741 = vmatprep.subr.mxu0 0.0
          %742 = vmatpush1.msra.mxu0 0.0
          %743 = vmatprep.subr.mxu0 0.0
          %744 = vmatpush1.msra.mxu0 0.0
          %745 = vmatprep.subr.mxu0 0.0
          %746 = vmatpush1.msra.mxu0 0.0
          %747 = vmatprep.subr.mxu0 0.0
          %748 = vmatpush1.msra.mxu0 0.0
          %749 = vmatprep.subr.mxu0 0.0
          %750 = vmatpush1.msra.mxu0 0.0
          %751 = vmatprep.subr.mxu0 0.0
          %752 = vmatpush1.msra.mxu0 0.0
          %753 = vmatprep.subr.mxu0 0.0
          %754 = vmatpush1.msra.mxu0 0.0
          %755 = vmatprep.subr.mxu0 0.0
          %756 = vmatpush1.msra.mxu0 0.0
          %757 = vmatprep.subr.mxu0 0.0
          %758 = vmatpush1.msra.mxu0 0.0
          %759 = vmatprep.subr.mxu0 0.0
          %760 = vmatpush1.msra.mxu0 0.0
          %761 = vmatprep.subr.mxu0 0.0
          %762 = vmatpush1.msra.mxu0 0.0
          %763 = vmatprep.subr.mxu0 0.0
          %764 = vmatpush1.msra.mxu0 0.0
          %765 = vmatprep.subr.mxu0 0.0
          %766 = vmatpush1.msra.mxu0 0.0
          %767 = vmatprep.subr.mxu0 0.0
          %768 = vmatpush1.msra.mxu0 0.0
          %769 = vmatprep.subr.mxu0 0.0
          %770 = vmatpush1.msra.mxu0 0.0
          %771 = vmatprep.subr.mxu0 0.0
          %772 = vmatpush1.msra.mxu0 0.0
          %773 = vmatprep.subr.mxu0 0.0
          %774 = vmatpush1.msra.mxu0 0.0
          %775 = vmatprep.subr.mxu0 0.0
          %776 = vmatpush1.msra.mxu0 0.0
          %777 = vmatprep.subr.mxu0 0.0
          %778 = vmatpush1.msra.mxu0 0.0
          %779 = vmatprep.subr.mxu0 0.0
          %780 = vmatpush1.msra.mxu0 0.0
          %781 = vmatprep.subr.mxu0 0.0
          %782 = vmatpush1.msra.mxu0 0.0
          %783 = vmatprep.subr.mxu0 0.0
          %784 = vmatpush1.msra.mxu0 0.0
          %785 = vmatprep.subr.mxu0 0.0
          %786 = vmatpush1.msra.mxu0 0.0
          %787 = vmatprep.subr.mxu0 0.0
          %788 = vmatpush1.msra.mxu0 0.0
          %789 = vmatprep.subr.mxu0 0.0
          %790 = vmatpush1.msra.mxu0 0.0
          %791 = vmatprep.subr.mxu0 0.0
          %792 = vmatpush1.msra.mxu0 0.0
          %793 = vmatprep.subr.mxu0 0.0
          %794 = vmatpush1.msra.mxu0 0.0
          %795 = vmatprep.subr.mxu0 0.0
          %796 = vmatpush1.msra.mxu0 0.0
          %797 = vmatprep.mubr.f32.mxu0 0.0
          %798 = vmatmul.mubr.f32.gmra.mrb[0].mxu0 %v731
          %v799 = vpop.f32.mrb[0].mxu0
          %v800 = vadd.f32 0.0, %v799
          %v801 = vpop.f32.mrb[0].mxu0
          %802 = vdwg.mxu0
          %v803 = vld [vmem:[%s5] sm:$0xff]
          %v804 = vld [vmem:[%s5 + $0x8] sm:$0xff]
          %v805 = vld [vmem:[%s5 + $0x10] sm:$0xff]
          %v806 = vld [vmem:[%s5 + $0x18] sm:$0xff]
          %v808 = vsel %vm729, %v721, 0
          %v811 = vsel %vm729, %v722, 0
          %v814 = vsel %vm729, %v723, 0
          %v817 = vsel %vm729, %v724, 0
          %819 = vmatprep.subr.mxu0 0.0
          %820 = vmatpush1.msra.mxu0 %v803
          %821 = vmatprep.subr.mxu0 0.0
          %822 = vmatpush1.msra.mxu0 %v804
          %823 = vmatprep.subr.mxu0 0.0
          %824 = vmatpush1.msra.mxu0 %v805
          %825 = vmatprep.subr.mxu0 0.0
          %826 = vmatpush1.msra.mxu0 %v806
          %827 = vmatprep.subr.mxu0 0.0
          %828 = vmatpush1.msra.mxu0 0.0
          %829 = vmatprep.subr.mxu0 0.0
          %830 = vmatpush1.msra.mxu0 0.0
          %831 = vmatprep.subr.mxu0 0.0
          %832 = vmatpush1.msra.mxu0 0.0
          %833 = vmatprep.subr.mxu0 0.0
          %834 = vmatpush1.msra.mxu0 0.0
          %835 = vmatprep.subr.mxu0 0.0
          %836 = vmatpush1.msra.mxu0 0.0
          %837 = vmatprep.subr.mxu0 0.0
          %838 = vmatpush1.msra.mxu0 0.0
          %839 = vmatprep.subr.mxu0 0.0
          %840 = vmatpush1.msra.mxu0 0.0
          %841 = vmatprep.subr.mxu0 0.0
          %842 = vmatpush1.msra.mxu0 0.0
          %843 = vmatprep.subr.mxu0 0.0
          %844 = vmatpush1.msra.mxu0 0.0
          %845 = vmatprep.subr.mxu0 0.0
          %846 = vmatpush1.msra.mxu0 0.0
          %847 = vmatprep.subr.mxu0 0.0
          %848 = vmatpush1.msra.mxu0 0.0
          %849 = vmatprep.subr.mxu0 0.0
          %850 = vmatpush1.msra.mxu0 0.0
          %851 = vmatprep.subr.mxu0 0.0
          %852 = vmatpush1.msra.mxu0 0.0
          %853 = vmatprep.subr.mxu0 0.0
          %854 = vmatpush1.msra.mxu0 0.0
          %855 = vmatprep.subr.mxu0 0.0
          %856 = vmatpush1.msra.mxu0 0.0
          %857 = vmatprep.subr.mxu0 0.0
          %858 = vmatpush1.msra.mxu0 0.0
          %859 = vmatprep.subr.mxu0 0.0
          %860 = vmatpush1.msra.mxu0 0.0
          %861 = vmatprep.subr.mxu0 0.0
          %862 = vmatpush1.msra.mxu0 0.0
          %863 = vmatprep.subr.mxu0 0.0
          %864 = vmatpush1.msra.mxu0 0.0
          %865 = vmatprep.subr.mxu0 0.0
          %866 = vmatpush1.msra.mxu0 0.0
          %867 = vmatprep.subr.mxu0 0.0
          %868 = vmatpush1.msra.mxu0 0.0
          %869 = vmatprep.subr.mxu0 0.0
          %870 = vmatpush1.msra.mxu0 0.0
          %871 = vmatprep.subr.mxu0 0.0
          %872 = vmatpush1.msra.mxu0 0.0
          %873 = vmatprep.subr.mxu0 0.0
          %874 = vmatpush1.msra.mxu0 0.0
          %875 = vmatprep.subr.mxu0 0.0
          %876 = vmatpush1.msra.mxu0 0.0
          %877 = vmatprep.subr.mxu0 0.0
          %878 = vmatpush1.msra.mxu0 0.0
          %879 = vmatprep.subr.mxu0 0.0
          %880 = vmatpush1.msra.mxu0 0.0
          %881 = vmatprep.subr.mxu0 0.0
          %882 = vmatpush1.msra.mxu0 0.0
          %883 = vmatprep.mubr.f32.mxu0 0.0
          %884 = vmatmul.mubr.f32.gmra.mrb[0].mxu0 %v808
          %v885 = vpop.f32.mrb[0].mxu0
          %v886 = vadd.f32 0.0, %v885
          %v887 = vpop.f32.mrb[0].mxu0
          %888 = vmatprep.mubr.f32.mxu0 0.0
          %889 = vmatmul.mubr.f32.gmra.mrb[0].mxu0 %v811
          %v890 = vpop.f32.mrb[0].mxu0
          %v891 = vadd.f32 0.0, %v890
          %v892 = vpop.f32.mrb[0].mxu0
          %893 = vmatprep.mubr.f32.mxu0 0.0
          %894 = vmatmul.mubr.f32.gmra.mrb[0].mxu0 %v814
          %v895 = vpop.f32.mrb[0].mxu0
          %v896 = vadd.f32 0.0, %v895
          %v897 = vpop.f32.mrb[0].mxu0
          %898 = vmatprep.mubr.f32.mxu0 0.0
          %899 = vmatmul.mubr.f32.gmra.mrb[0].mxu0 %v817
          %v900 = vpop.f32.mrb[0].mxu0
          %v901 = vadd.f32 0.0, %v900
          %v902 = vpop.f32.mrb[0].mxu0
          %903 = vdwg.mxu0
          %v906 = vunpack.c.l.s4 1966171168
          %v907 = vunpack.c.0.s8 %v906
          %v908 = vlaneseq
          %v909 = vshrl.u32 %v908, 7
          %v910 = vsub.s32 %v907, %v909
          %v911 = vrot.slane %v800, %v910
          %v912 = vcombine.high %v911, %v911
          %v914 = vunpack.c.l.s4 1966171168
          %v915 = vunpack.c.0.s8 %v914
          %v916 = vlaneseq
          %v917 = vshrl.u32 %v916, 7
          %v918 = vsub.s32 %v915, %v917
          %v919 = vrot.slane %v911, %v918
          %v921 = vunpack.c.l.s4 1966171168
          %v922 = vunpack.c.0.s8 %v921
          %v923 = vlaneseq
          %v924 = vshrl.u32 %v923, 7
          %v925 = vsub.s32 %v922, %v924
          %v926 = vrot.slane %v912, %v925
          %v927 = vcombine.high %v919, %v919
          %v928 = vcombine.high %v926, %v926
          %v929 = vlaneseq
          %v930 = vshrl.u32 %v929, 7
          %v931 = vsub.s32 0, %v930
          %v932 = vrot.slane %v919, %v931
          %v933 = vlaneseq
          %v934 = vshrl.u32 %v933, 7
          %v935 = vsub.s32 0, %v934
          %v936 = vrot.slane %v926, %v935
          %v937 = vlaneseq
          %v938 = vshrl.u32 %v937, 7
          %v939 = vsub.s32 0, %v938
          %v940 = vrot.slane %v927, %v939
          %v941 = vlaneseq
          %v942 = vshrl.u32 %v941, 7
          %v943 = vsub.s32 0, %v942
          %v944 = vrot.slane %v928, %v943
          %v949 = vadd.f32 %v886, %v932
          %v950 = vadd.f32 %v891, %v936
          %v951 = vadd.f32 %v896, %v940
          %v952 = vadd.f32 %v901, %v944
          %v953 = vld [vmem:[%s6] sm:$0x1]
          %v955 = vlaneseq
          %v956 = vshrl.u32 %v955, 7
          %v957 = vsub.s32 0, %v956
          %v958 = vrot.slane %v953, %v957
          %v960 = vadd.f32 %v949, %v958
          %v961 = vadd.f32 %v950, %v958
          %v962 = vadd.f32 %v951, %v958
          %v963 = vadd.f32 %v952, %v958
          %v964 = vmax.f32 %v960, 0.0
          %v965 = vmax.f32 %v961, 0.0
          %v966 = vmax.f32 %v962, 0.0
          %v967 = vmax.f32 %v963, 0.0
          %v968 = vld [vmem:[%s7] sm:$0x1]
          %v970 = vlaneseq
          %v971 = vshrl.u32 %v970, 7
          %v972 = vsub.s32 0, %v971
          %v973 = vrot.slane %v968, %v972
          %v975 = vmul.f32 %v964, %v973
          %v976 = vmul.f32 %v965, %v973
          %v977 = vmul.f32 %v966, %v973
          %v978 = vmul.f32 %v967, %v973
          %v979 = vsel %vm729, %v975, 0.0
          %980 = vadd.xlane.f32.xlu0 %v979
          %v981 = vpop.xlane.xlu0 %980
          %v982 = vsel %vm729, %v976, 0.0
          %983 = vadd.xlane.f32.xlu0 %v982
          %v984 = vpop.xlane.xlu0 %983
          %v985 = vsel %vm729, %v977, 0.0
          %986 = vadd.xlane.f32.xlu0 %v985
          %v987 = vpop.xlane.xlu0 %986
          %v988 = vsel %vm729, %v978, 0.0
          %989 = vadd.xlane.f32.xlu0 %v988
          %v990 = vpop.xlane.xlu0 %989
          %v995 = vlaneseq
          %v996 = vand.u32 %v995, 127
          %v997 = vlaneseq
          %v998 = vshrl.u32 %v997, 7
          %v999 = vsub.s32 %v996, %v998
          %v1000 = vrot.slane %v981, %v999
          %v1001 = vlaneseq
          %v1002 = vshrl.u32 %v1001, 7
          %v1003 = vsub.s32 %v996, %v1002
          %v1004 = vrot.slane %v984, %v1003
          %v1005 = vlaneseq
          %v1006 = vshrl.u32 %v1005, 7
          %v1007 = vsub.s32 %v996, %v1006
          %v1008 = vrot.slane %v987, %v1007
          %v1009 = vlaneseq
          %v1010 = vshrl.u32 %v1009, 7
          %v1011 = vsub.s32 %v996, %v1010
          %v1012 = vrot.slane %v990, %v1011
          %vm1013 = vcmask 1041409
          %v1014 = vsel %vm1013, %v1004, %v1000
          %vm1015 = vcmask 1042434
          %v1016 = vsel %vm1015, %v1008, %v1014
          %vm1017 = vcmask 1043459
          %v1018 = vsel %vm1017, %v1012, %v1016
          %vm1020 = vcmask 60416
          %v1021 = vsel %vm1020, %v1018, -inf
          %1022 = vmax.xlane.f32.xlu0 %v1021
          %v1023 = vpop.xlane.xlu0 %1022
          %v1025 = vlaneseq
          %v1026 = vshrl.u32 %v1025, 7
          %v1027 = vsub.s32 0, %v1026
          %v1028 = vrot.slane %v1023, %v1027
          %v1029 = vlaneseq
          %v1030 = vshrl.u32 %v1029, 7
          %v1031 = vsub.s32 1, %v1030
          %v1032 = vrot.slane %v1023, %v1031
          %v1033 = vlaneseq
          %v1034 = vshrl.u32 %v1033, 7
          %v1035 = vsub.s32 2, %v1034
          %v1036 = vrot.slane %v1023, %v1035
          %v1037 = vlaneseq
          %v1038 = vshrl.u32 %v1037, 7
          %v1039 = vsub.s32 3, %v1038
          %v1040 = vrot.slane %v1023, %v1039
          %v1045 = vsub.f32 %v981, %v1028
          %v1046 = vsub.f32 %v984, %v1032
          %v1047 = vsub.f32 %v987, %v1036
          %v1048 = vsub.f32 %v990, %v1040
          %v1049 = vmul.f32 %v1045, 1.442695
          %v1050 = vpow.pop %v1049
          %v1051 = vmul.f32 %v1046, 1.442695
          %v1052 = vpow.pop %v1051
          %v1053 = vmul.f32 %v1047, 1.442695
          %v1054 = vpow.pop %v1053
          %v1055 = vmul.f32 %v1048, 1.442695
          %v1056 = vpow.pop %v1055
          %1061 = vset.pattern.permute.xlu0 0
          %1062 = vperm.xlu0 %1061, %v1050
          %v1063 = vpop.permute.xlu0 %1062
          %1064 = vset.pattern.permute.xlu0 0
          %1065 = vperm.xlu0 %1064, %v1052
          %v1066 = vpop.permute.xlu0 %1065
          %1067 = vset.pattern.permute.xlu0 0
          %1068 = vperm.xlu0 %1067, %v1054
          %v1069 = vpop.permute.xlu0 %1068
          %1070 = vset.pattern.permute.xlu0 0
          %1071 = vperm.xlu0 %1070, %v1056
          %v1072 = vpop.permute.xlu0 %1071
          %v1073 = vlaneseq
          %v1074 = vshrl.u32 %v1073, 7
          %v1075 = vsub.s32 %v996, %v1074
          %v1076 = vrot.slane %v1063, %v1075
          %v1077 = vlaneseq
          %v1078 = vshrl.u32 %v1077, 7
          %v1079 = vsub.s32 %v996, %v1078
          %v1080 = vrot.slane %v1066, %v1079
          %v1081 = vlaneseq
          %v1082 = vshrl.u32 %v1081, 7
          %v1083 = vsub.s32 %v996, %v1082
          %v1084 = vrot.slane %v1069, %v1083
          %v1085 = vlaneseq
          %v1086 = vshrl.u32 %v1085, 7
          %v1087 = vsub.s32 %v996, %v1086
          %v1088 = vrot.slane %v1072, %v1087
          %v1089 = vsel %vm1013, %v1080, %v1076
          %v1090 = vsel %vm1015, %v1084, %v1089
          %v1091 = vsel %vm1017, %v1088, %v1090
          %v1093 = vsel %vm1020, %v1091, 0.0
          %1094 = vadd.xlane.f32.xlu0 %v1093
          %v1095 = vpop.xlane.xlu0 %1094
          %v1097 = vlaneseq
          %v1098 = vshrl.u32 %v1097, 7
          %v1099 = vsub.s32 0, %v1098
          %v1100 = vrot.slane %v1095, %v1099
          %v1101 = vlaneseq
          %v1102 = vshrl.u32 %v1101, 7
          %v1103 = vsub.s32 1, %v1102
          %v1104 = vrot.slane %v1095, %v1103
          %v1105 = vlaneseq
          %v1106 = vshrl.u32 %v1105, 7
          %v1107 = vsub.s32 2, %v1106
          %v1108 = vrot.slane %v1095, %v1107
          %v1109 = vlaneseq
          %v1110 = vshrl.u32 %v1109, 7
          %v1111 = vsub.s32 3, %v1110
          %v1112 = vrot.slane %v1095, %v1111
          %v1117 = vrcp.pop %v1100
          %v1118 = vmul.f32 %v1050, %v1117
          %v1119 = vrcp.pop %v1104
          %v1120 = vmul.f32 %v1052, %v1119
          %v1121 = vrcp.pop %v1108
          %v1122 = vmul.f32 %v1054, %v1121
          %v1123 = vrcp.pop %v1112
          %v1124 = vmul.f32 %v1056, %v1123
          %1129 = vset.pattern.permute.xlu0 0
          %1130 = vperm.xlu0 %1129, %v1118
          %v1131 = vpop.permute.xlu0 %1130
          %1132 = vset.pattern.permute.xlu0 0
          %1133 = vperm.xlu0 %1132, %v1120
          %v1134 = vpop.permute.xlu0 %1133
          %1135 = vset.pattern.permute.xlu0 0
          %1136 = vperm.xlu0 %1135, %v1122
          %v1137 = vpop.permute.xlu0 %1136
          %1138 = vset.pattern.permute.xlu0 0
          %1139 = vperm.xlu0 %1138, %v1124
          %v1140 = vpop.permute.xlu0 %1139
          %v1141 = vlaneseq
          %v1142 = vshrl.u32 %v1141, 7
          %v1143 = vsub.s32 %v996, %v1142
          %v1144 = vrot.slane %v1131, %v1143
          %v1145 = vlaneseq
          %v1146 = vshrl.u32 %v1145, 7
          %v1147 = vsub.s32 %v996, %v1146
          %v1148 = vrot.slane %v1134, %v1147
          %v1149 = vlaneseq
          %v1150 = vshrl.u32 %v1149, 7
          %v1151 = vsub.s32 %v996, %v1150
          %v1152 = vrot.slane %v1137, %v1151
          %v1153 = vlaneseq
          %v1154 = vshrl.u32 %v1153, 7
          %v1155 = vsub.s32 %v996, %v1154
          %v1156 = vrot.slane %v1140, %v1155
          %v1157 = vsel %vm1013, %v1148, %v1144
          %v1158 = vsel %vm1015, %v1152, %v1157
          %v1159 = vsel %vm1017, %v1156, %v1158
          %1161 = vst.msk [vmem:[#allocation14] sm:$0xf] %vm1020, %v1159
          %v1166 = vmul.f32 %v1131, %v721
          %v1167 = vmul.f32 %v1134, %v722
          %v1168 = vmul.f32 %v1137, %v723
          %v1169 = vmul.f32 %v1140, %v724
          %v1170 = vsel %vm729, %v1166, 0.0
          %v1171 = vrot.slane %v1170, 4
          %v1172 = vadd.f32 %v1170, %v1171
          %v1173 = vrot.slane %v1172, 2
          %v1174 = vadd.f32 %v1172, %v1173
          %v1175 = vrot.slane %v1174, 1
          %v1176 = vadd.f32 %v1174, %v1175
          %v1177 = vsel %vm729, %v1167, 0.0
          %v1178 = vrot.slane %v1177, 4
          %v1179 = vadd.f32 %v1177, %v1178
          %v1180 = vrot.slane %v1179, 2
          %v1181 = vadd.f32 %v1179, %v1180
          %v1182 = vrot.slane %v1181, 1
          %v1183 = vadd.f32 %v1181, %v1182
          %v1184 = vsel %vm729, %v1168, 0.0
          %v1185 = vrot.slane %v1184, 4
          %v1186 = vadd.f32 %v1184, %v1185
          %v1187 = vrot.slane %v1186, 2
          %v1188 = vadd.f32 %v1186, %v1187
          %v1189 = vrot.slane %v1188, 1
          %v1190 = vadd.f32 %v1188, %v1189
          %v1191 = vsel %vm729, %v1169, 0.0
          %v1192 = vrot.slane %v1191, 4
          %v1193 = vadd.f32 %v1191, %v1192
          %v1194 = vrot.slane %v1193, 2
          %v1195 = vadd.f32 %v1193, %v1194
          %v1196 = vrot.slane %v1195, 1
          %v1197 = vadd.f32 %v1195, %v1196
          %s1198 = smul.u32 1, 1
          %s1199 = sshll.u32 %s1198, 4
          %1200 = dma.done [#allocation3], %s1199
          %s1201 = sshll.u32 %s1198, 4
          %1202 = dma.done %s581, %s1201
          %s1203 = sshll.u32 %s1198, 4
          %1204 = dma.done %s628, %s1203
          %s1205 = sshll.u32 %s1198, 4
          %1206 = dma.done %s675, %s1205
          %v1207 = vld [vmem:[#allocation2] sm:$0xf]
          %v1212 = vsel %vm1013, %v1183, %v1176
          %v1213 = vsel %vm1015, %v1190, %v1212
          %v1214 = vsel %vm1017, %v1197, %v1213
          %1215 = vrot.lane.b32.xlu0 %v1214, 32
          %v1216 = vpop.permute.xlu0 %1215
          %v1218 = vsel %vm729, %v1207, %v1216
          %v1219 = vld [vmem:[%s8] sm:$0xff]
          %v1220 = vld [vmem:[%s8 + $0x8] sm:$0xff]
          %v1221 = vld [vmem:[%s8 + $0x10] sm:$0xff]
          %v1222 = vld [vmem:[%s8 + $0x18] sm:$0xff]
          %v1223 = vld [vmem:[%s8 + $0x20] sm:$0xff]
          %v1224 = vld [vmem:[%s8 + $0x28] sm:$0xff]
          %v1225 = vld [vmem:[%s8 + $0x30] sm:$0xff]
          %v1226 = vld [vmem:[%s8 + $0x38] sm:$0xff]
          %v1227 = vld [vmem:[%s10] sm:$0x1]
          %v1229 = vlaneseq
          %v1230 = vshrl.u32 %v1229, 7
          %v1231 = vsub.s32 0, %v1230
          %v1232 = vrot.slane %v1227, %v1231
          %vm1234 = vcmask 523264
          %v1236 = vsel %vm1234, %v1218, 0
          %1238 = vmatprep.subr.mxu0 0.0
          %1239 = vmatpush1.msra.mxu0 %v1219
          %1240 = vmatprep.subr.mxu0 0.0
          %1241 = vmatpush1.msra.mxu0 %v1220
          %1242 = vmatprep.subr.mxu0 0.0
          %1243 = vmatpush1.msra.mxu0 %v1221
          %1244 = vmatprep.subr.mxu0 0.0
          %1245 = vmatpush1.msra.mxu0 %v1222
          %1246 = vmatprep.subr.mxu0 0.0
          %1247 = vmatpush1.msra.mxu0 %v1223
          %1248 = vmatprep.subr.mxu0 0.0
          %1249 = vmatpush1.msra.mxu0 %v1224
          %1250 = vmatprep.subr.mxu0 0.0
          %1251 = vmatpush1.msra.mxu0 %v1225
          %1252 = vmatprep.subr.mxu0 0.0
          %1253 = vmatpush1.msra.mxu0 %v1226
          %1254 = vmatprep.subr.mxu0 0.0
          %1255 = vmatpush1.msra.mxu0 0.0
          %1256 = vmatprep.subr.mxu0 0.0
          %1257 = vmatpush1.msra.mxu0 0.0
          %1258 = vmatprep.subr.mxu0 0.0
          %1259 = vmatpush1.msra.mxu0 0.0
          %1260 = vmatprep.subr.mxu0 0.0
          %1261 = vmatpush1.msra.mxu0 0.0
          %1262 = vmatprep.subr.mxu0 0.0
          %1263 = vmatpush1.msra.mxu0 0.0
          %1264 = vmatprep.subr.mxu0 0.0
          %1265 = vmatpush1.msra.mxu0 0.0
          %1266 = vmatprep.subr.mxu0 0.0
          %1267 = vmatpush1.msra.mxu0 0.0
          %1268 = vmatprep.subr.mxu0 0.0
          %1269 = vmatpush1.msra.mxu0 0.0
          %1270 = vmatprep.subr.mxu0 0.0
          %1271 = vmatpush1.msra.mxu0 0.0
          %1272 = vmatprep.subr.mxu0 0.0
          %1273 = vmatpush1.msra.mxu0 0.0
          %1274 = vmatprep.subr.mxu0 0.0
          %1275 = vmatpush1.msra.mxu0 0.0
          %1276 = vmatprep.subr.mxu0 0.0
          %1277 = vmatpush1.msra.mxu0 0.0
          %1278 = vmatprep.subr.mxu0 0.0
          %1279 = vmatpush1.msra.mxu0 0.0
          %1280 = vmatprep.subr.mxu0 0.0
          %1281 = vmatpush1.msra.mxu0 0.0
          %1282 = vmatprep.subr.mxu0 0.0
          %1283 = vmatpush1.msra.mxu0 0.0
          %1284 = vmatprep.subr.mxu0 0.0
          %1285 = vmatpush1.msra.mxu0 0.0
          %1286 = vmatprep.subr.mxu0 0.0
          %1287 = vmatpush1.msra.mxu0 0.0
          %1288 = vmatprep.subr.mxu0 0.0
          %1289 = vmatpush1.msra.mxu0 0.0
          %1290 = vmatprep.subr.mxu0 0.0
          %1291 = vmatpush1.msra.mxu0 0.0
          %1292 = vmatprep.subr.mxu0 0.0
          %1293 = vmatpush1.msra.mxu0 0.0
          %1294 = vmatprep.subr.mxu0 0.0
          %1295 = vmatpush1.msra.mxu0 0.0
          %1296 = vmatprep.subr.mxu0 0.0
          %1297 = vmatpush1.msra.mxu0 0.0
          %1298 = vmatprep.subr.mxu0 0.0
          %1299 = vmatpush1.msra.mxu0 0.0
          %1300 = vmatprep.subr.mxu0 0.0
          %1301 = vmatpush1.msra.mxu0 0.0
          %1302 = vmatprep.mubr.f32.mxu0 0.0
          %1303 = vmatmul.mubr.f32.gmra.mrb[0].mxu0 %v1236
          %v1304 = vpop.f32.mrb[0].mxu0
          %v1305 = vadd.f32 %v1232, %v1304
          %v1306 = vpop.f32.mrb[0].mxu0
          %1307 = vdwg.mxu0
          %v1308 = vld [vmem:[%s9] sm:$0xff]
          %v1309 = vld [vmem:[%s9 + $0x8] sm:$0xff]
          %v1310 = vld [vmem:[%s9 + $0x10] sm:$0xff]
          %v1311 = vld [vmem:[%s9 + $0x18] sm:$0xff]
          %v1312 = vld [vmem:[%s11] sm:$0x1]
          %v1314 = vlaneseq
          %v1315 = vshrl.u32 %v1314, 7
          %v1316 = vsub.s32 0, %v1315
          %v1317 = vrot.slane %v1312, %v1316
          %1319 = vmatprep.subr.mxu0 0.0
          %1320 = vmatpush1.msra.mxu0 %v1308
          %1321 = vmatprep.subr.mxu0 0.0
          %1322 = vmatpush1.msra.mxu0 %v1309
          %1323 = vmatprep.subr.mxu0 0.0
          %1324 = vmatpush1.msra.mxu0 %v1310
          %1325 = vmatprep.subr.mxu0 0.0
          %1326 = vmatpush1.msra.mxu0 %v1311
          %1327 = vmatprep.subr.mxu0 0.0
          %1328 = vmatpush1.msra.mxu0 0.0
          %1329 = vmatprep.subr.mxu0 0.0
          %1330 = vmatpush1.msra.mxu0 0.0
          %1331 = vmatprep.subr.mxu0 0.0
          %1332 = vmatpush1.msra.mxu0 0.0
          %1333 = vmatprep.subr.mxu0 0.0
          %1334 = vmatpush1.msra.mxu0 0.0
          %1335 = vmatprep.subr.mxu0 0.0
          %1336 = vmatpush1.msra.mxu0 0.0
          %1337 = vmatprep.subr.mxu0 0.0
          %1338 = vmatpush1.msra.mxu0 0.0
          %1339 = vmatprep.subr.mxu0 0.0
          %1340 = vmatpush1.msra.mxu0 0.0
          %1341 = vmatprep.subr.mxu0 0.0
          %1342 = vmatpush1.msra.mxu0 0.0
          %1343 = vmatprep.subr.mxu0 0.0
          %1344 = vmatpush1.msra.mxu0 0.0
          %1345 = vmatprep.subr.mxu0 0.0
          %1346 = vmatpush1.msra.mxu0 0.0
          %1347 = vmatprep.subr.mxu0 0.0
          %1348 = vmatpush1.msra.mxu0 0.0
          %1349 = vmatprep.subr.mxu0 0.0
          %1350 = vmatpush1.msra.mxu0 0.0
          %1351 = vmatprep.subr.mxu0 0.0
          %1352 = vmatpush1.msra.mxu0 0.0
          %1353 = vmatprep.subr.mxu0 0.0
          %1354 = vmatpush1.msra.mxu0 0.0
          %1355 = vmatprep.subr.mxu0 0.0
          %1356 = vmatpush1.msra.mxu0 0.0
          %1357 = vmatprep.subr.mxu0 0.0
          %1358 = vmatpush1.msra.mxu0 0.0
          %1359 = vmatprep.subr.mxu0 0.0
          %1360 = vmatpush1.msra.mxu0 0.0
          %1361 = vmatprep.subr.mxu0 0.0
          %1362 = vmatpush1.msra.mxu0 0.0
          %1363 = vmatprep.subr.mxu0 0.0
          %1364 = vmatpush1.msra.mxu0 0.0
          %1365 = vmatprep.subr.mxu0 0.0
          %1366 = vmatpush1.msra.mxu0 0.0
          %1367 = vmatprep.subr.mxu0 0.0
          %1368 = vmatpush1.msra.mxu0 0.0
          %1369 = vmatprep.subr.mxu0 0.0
          %1370 = vmatpush1.msra.mxu0 0.0
          %1371 = vmatprep.subr.mxu0 0.0
          %1372 = vmatpush1.msra.mxu0 0.0
          %1373 = vmatprep.subr.mxu0 0.0
          %1374 = vmatpush1.msra.mxu0 0.0
          %1375 = vmatprep.subr.mxu0 0.0
          %1376 = vmatpush1.msra.mxu0 0.0
          %1377 = vmatprep.subr.mxu0 0.0
          %1378 = vmatpush1.msra.mxu0 0.0
          %1379 = vmatprep.subr.mxu0 0.0
          %1380 = vmatpush1.msra.mxu0 0.0
          %1381 = vmatprep.subr.mxu0 0.0
          %1382 = vmatpush1.msra.mxu0 0.0
          %1383 = vmatprep.mubr.f32.mxu0 0.0
          %1384 = vmatmul.mubr.f32.gmra.mrb[0].mxu0 %v731
          %v1385 = vpop.f32.mrb[0].mxu0
          %v1386 = vadd.f32 %v1317, %v1385
          %v1387 = vpop.f32.mrb[0].mxu0
          %1388 = vdwg.mxu0
          %v1389 = vadd.f32 %v1305, %v1386
          %v1390 = vxor.u32 %v1389, 2147483648
          %v1391 = vmul.f32 %v1390, 1.442695
          %v1392 = vpow.pop %v1391
          %v1393 = vadd.f32 %v1392, 1.0
          %v1394 = vrcp.pop %v1393
          %v1395 = vmul.f32 1.0, %v1394
          %1397 = vrot.lane.b32.xlu0 %v1386, 64
          %v1398 = vpop.permute.xlu0 %1397
          %v1400 = vmul.f32 %v1395, %v1398
          %1402 = vrot.lane.b32.xlu0 %v1400, 64
          %v1403 = vpop.permute.xlu0 %1402
          %v1405 = vadd.f32 %v1305, %v1403
          %v1406 = vtanh.pop %v1405
          %v1407 = vsub.f32 1.0, %v1395
          %1409 = vrot.lane.b32.xlu0 %v1406, 96
          %v1410 = vpop.permute.xlu0 %1409
          %v1412 = vmul.f32 %v1407, %v1410
          %1413 = vrot.lane.b32.xlu0 %v720, 32
          %v1414 = vpop.permute.xlu0 %1413
          %v1416 = vmul.f32 %v1395, %v1414
          %v1417 = vadd.f32 %v1412, %v1416
          %1419 = vrot.lane.b32.xlu0 %v1417, 96
          %v1420 = vpop.permute.xlu0 %1419
          %vm1422 = vcmask 257024
          %1423 = vst.msk [vmem:[#allocation12] sm:$0xf] %vm1422, %v1420
          %v1424 = vsel %vm729, %v1420, %v1216
          %v1425 = vpack.c.bf16 %v1424, %v1424
          %vm1426 = vcmask 517120
          %1427 = vst.msk [vmem:[#allocation4] sm:$0x3] %vm1426, %v1425
        $region110: #{tpu_custom_call.1} parent=101 // pred_fallthru
          _
        %s1428 = smul.u32 %s36, 256
        %v1429 = vld [vmem:[#allocation4] sm:$0x3]
        %v1430 = vld [vmem:[%s483] sm:$0xff]
        %v1431 = vld [vmem:[%s483 + $0x8] sm:$0xff]
        %v1432 = vld [vmem:[%s483 + $0x10] sm:$0xff]
        %v1433 = vld [vmem:[%s483 + $0x18] sm:$0xff]
        %v1434 = vld [vmem:[%s483 + $0x20] sm:$0xff]
        %v1435 = vld [vmem:[%s483 + $0x28] sm:$0xff]
        %v1436 = vld [vmem:[%s483 + $0x30] sm:$0xff]
        %v1437 = vld [vmem:[%s483 + $0x38] sm:$0xff]
        %s1438 = sshra.s32 %s1428, 7
        %s1439 = sand.u32 %s1428, 127
        %s1440 = scalar_lea.vmem %s13, %s1438
        %v1441 = vld [vmem:[%s1440] sm:$0x3]
        %v1443 = vlaneseq
        %v1444 = vshrl.u32 %v1443, 7
        %v1445 = vsub.s32 0, %v1444
        %v1446 = vrot.slane %v1441, %v1445
        %v1447 = vlaneseq
        %v1448 = vshrl.u32 %v1447, 7
        %v1449 = vsub.s32 1, %v1448
        %v1450 = vrot.slane %v1441, %v1449
        %v1461 = vunpack.c.l.b16 %v1430
        %v1462 = vunpack.c.h.b16 %v1430
        %v1463 = vunpack.c.l.b16 %v1431
        %v1464 = vunpack.c.h.b16 %v1431
        %v1465 = vunpack.c.l.b16 %v1432
        %v1466 = vunpack.c.h.b16 %v1432
        %v1467 = vunpack.c.l.b16 %v1433
        %v1468 = vunpack.c.h.b16 %v1433
        %v1469 = vunpack.c.l.b16 %v1434
        %v1470 = vunpack.c.h.b16 %v1434
        %v1471 = vunpack.c.l.b16 %v1435
        %v1472 = vunpack.c.h.b16 %v1435
        %v1473 = vunpack.c.l.b16 %v1436
        %v1474 = vunpack.c.h.b16 %v1436
        %v1475 = vunpack.c.l.b16 %v1437
        %v1476 = vunpack.c.h.b16 %v1437
        %v1477 = vpack.c.b16 %v1463, %v1461
        %v1478 = vpack.c.b16 %v1464, %v1462
        %v1479 = vpack.c.b16 %v1467, %v1465
        %v1480 = vpack.c.b16 %v1468, %v1466
        %v1481 = vpack.c.b16 %v1471, %v1469
        %v1482 = vpack.c.b16 %v1472, %v1470
        %v1483 = vpack.c.b16 %v1475, %v1473
        %v1484 = vpack.c.b16 %v1476, %v1474
        %vm1493 = vcmask 523264
        %v1495 = vsel %vm1493, %v1429, 0
        %1497 = vmatprep.subr.bf16.mxu0 %v1478
        %1498 = vmatpush1.bf16.msra.mxu0 %v1477
        %1499 = vmatprep.subr.bf16.mxu0 %v1480
        %1500 = vmatpush1.bf16.msra.mxu0 %v1479
        %1501 = vmatprep.subr.bf16.mxu0 %v1482
        %1502 = vmatpush1.bf16.msra.mxu0 %v1481
        %1503 = vmatprep.subr.bf16.mxu0 %v1484
        %1504 = vmatpush1.bf16.msra.mxu0 %v1483
        %1505 = vmatprep.subr.bf16.mxu0 0
        %1506 = vmatpush1.bf16.msra.mxu0 0
        %1507 = vmatprep.subr.bf16.mxu0 0
        %1508 = vmatpush1.bf16.msra.mxu0 0
        %1509 = vmatprep.subr.bf16.mxu0 0
        %1510 = vmatpush1.bf16.msra.mxu0 0
        %1511 = vmatprep.subr.bf16.mxu0 0
        %1512 = vmatpush1.bf16.msra.mxu0 0
        %1513 = vmatprep.subr.bf16.mxu0 0
        %1514 = vmatpush1.bf16.msra.mxu0 0
        %1515 = vmatprep.subr.bf16.mxu0 0
        %1516 = vmatpush1.bf16.msra.mxu0 0
        %1517 = vmatprep.subr.bf16.mxu0 0
        %1518 = vmatpush1.bf16.msra.mxu0 0
        %1519 = vmatprep.subr.bf16.mxu0 0
        %1520 = vmatpush1.bf16.msra.mxu0 0
        %1521 = vmatprep.subr.bf16.mxu0 0
        %1522 = vmatpush1.bf16.msra.mxu0 0
        %1523 = vmatprep.subr.bf16.mxu0 0
        %1524 = vmatpush1.bf16.msra.mxu0 0
        %1525 = vmatprep.subr.bf16.mxu0 0
        %1526 = vmatpush1.bf16.msra.mxu0 0
        %1527 = vmatprep.subr.bf16.mxu0 0
        %1528 = vmatpush1.bf16.msra.mxu0 0
        %1529 = vmatprep.mubr.bf16.mxu0 0
        %1530 = vmatmul.mubr.bf16.gmra.mrb[0].mxu0 %v1495
        %v1531 = vpop.f32.mrb[0].mxu0
        %v1532 = vadd.f32 %v1446, %v1531
        %v1533 = vpop.f32.mrb[0].mxu0
        %v1534 = vadd.f32 %v1450, %v1533
        %v1535 = vpop.f32.mrb[0].mxu0
        %v1536 = vpop.f32.mrb[0].mxu0
        %1537 = vdwg.mxu0
        %v1540 = vcombine.low %v1532, %v1534
        %s1542 = smul.addr %s1438, 4
        %s1543 = scalar_lea.vmem [#allocation10], %s1542
        %1544 = vst [vmem:[%s1543] sm:$0xff] %v1540
        %v1545 = vld [vmem:[#allocation5] sm:$0xf]
        %vm1546 = vcmask 1043456
        %v1547 = vsel %vm1546, %v1532, -inf
        %v1548 = vsel %vm1546, %v1534, -inf
        %v1549 = vmax.f32 %v1547, %v1548
        %1550 = vmax.xlane.f32.xlu0 %v1549
        %v1551 = vpop.xlane.xlu0 %1550
        %v1552 = vmax.f32 %v1545, %v1551
        %v1553 = vld [vmem:[#allocation6] sm:$0xf]
        %v1554 = vsub.f32 %v1545, %v1552
        %v1555 = vmul.f32 %v1554, 1.442695
        %v1556 = vpow.pop %v1555
        %v1557 = vmul.f32 %v1553, %v1556
        %1559 = vset.pattern.permute.xlu0 0
        %1560 = vperm.xlu0 %1559, %v1552
        %v1561 = vpop.permute.xlu0 %1560
        %v1563 = vsub.f32 %v1532, %v1561
        %v1564 = vsub.f32 %v1534, %v1561
        %v1565 = vmul.f32 %v1563, 1.442695
        %v1566 = vpow.pop %v1565
        %v1567 = vmul.f32 %v1564, 1.442695
        %v1568 = vpow.pop %v1567
        %v1569 = vsel %vm1546, %v1566, 0.0
        %v1570 = vsel %vm1546, %v1568, 0.0
        %v1571 = vadd.f32 %v1569, %v1570
        %1572 = vadd.xlane.f32.xlu0 %v1571
        %v1573 = vpop.xlane.xlu0 %1572
        %v1574 = vadd.f32 %v1557, %v1573
        %vm1575 = vcmask 3072
        %1576 = vst.msk [vmem:[#allocation6] sm:$0xf] %vm1575, %v1574
        %1577 = vst.msk [vmem:[#allocation5] sm:$0xf] %vm1575, %v1552
        %p1578 = scmp.eq.s32.totalorder %s36, 1
        // Predicated region
        $region231: #{tpu_custom_call.1} parent=101 // pred_check
          %p1579 = pneg %p1578
        $region232: #{tpu_custom_call.1} parent=101 // pred_check_branch
          %1581 = sbr.rel (%p1579) target = $region234
        $region233: #{tpu_custom_call.1} parent=101 // pred_region
          %v1582 = vld [vmem:[#allocation10] sm:$0xff]
          %v1583 = vld [vmem:[#allocation10 + $0x8] sm:$0xff]
          %v1584 = vld [vmem:[#allocation5] sm:$0xf]
          %v1585 = vld [vmem:[#allocation6] sm:$0xf]
          %v1586 = vlog2.pop %v1585
          %v1587 = vmul.f32 %v1586, 0.6931472
          %v1588 = vadd.f32 %v1584, %v1587
          %1590 = vset.pattern.permute.xlu0 0
          %1591 = vperm.xlu0 %1590, %v1588
          %v1592 = vpop.permute.xlu0 %1591
          %v1594 = vunpack.c.l.s4 839922192
          %v1595 = vunpack.c.0.s8 %v1594
          %v1596 = vlaneseq
          %v1597 = vshrl.u32 %v1596, 7
          %v1598 = vsub.s32 %v1595, %v1597
          %v1599 = vrot.slane %v1592, %v1598
          %v1601 = vsub.f32 %v1582, %v1599
          %v1602 = vsub.f32 %v1583, %v1599
          %1603 = vst [vmem:[#allocation10] sm:$0xff] %v1601
          %1604 = vst [vmem:[#allocation10 + $0x8] sm:$0xff] %v1602
        $region234: #{tpu_custom_call.1} parent=101 // pred_fallthru
          _
        // Predicated region
        $region235: #{tpu_custom_call.1} parent=101 // pred_check
          %p1605 = pneg %p306
        $region236: #{tpu_custom_call.1} parent=101 // pred_check_branch
          %1607 = sbr.rel (%p1605) target = $region238
        $region237: #{tpu_custom_call.1} parent=101 // pred_region
          %s1609 = ssub.s32 256, 256
          %1610 = vsyncadd [#allocation11], %s1609
          %s1612 = sshll.u32 [#allocation10], 4
          %s1613 = int_to_ptr.vmem [resolvable:$true] %s1612
          %1615 = dma.vmem_to_hbm [thread:$0]  %s1613, 256, %s14, [#allocation11]
        $region238: #{tpu_custom_call.1} parent=101 // pred_fallthru
          _
        // Predicated region
        $region239: #{tpu_custom_call.1} parent=101 // pred_check
          %p1616 = pneg %p327
        $region240: #{tpu_custom_call.1} parent=101 // pred_check_branch
          %1618 = sbr.rel (%p1616) target = $region242
        $region241: #{tpu_custom_call.1} parent=101 // pred_region
          %s1620 = ssub.s32 64, 64
          %1621 = vsyncadd [#allocation13], %s1620
          %s1623 = sshll.u32 [#allocation12], 4
          %s1624 = int_to_ptr.vmem [resolvable:$true] %s1623
          %1626 = dma.vmem_to_hbm [thread:$0]  %s1624, 64, %s15, [#allocation13]
        $region242: #{tpu_custom_call.1} parent=101 // pred_fallthru
          _
        // Predicated region
        $region243: #{tpu_custom_call.1} parent=101 // pred_check
          %p1627 = pneg %p348
        $region244: #{tpu_custom_call.1} parent=101 // pred_check_branch
          %1629 = sbr.rel (%p1627) target = $region246
        $region245: #{tpu_custom_call.1} parent=101 // pred_region
          %s1631 = ssub.s32 64, 64
          %1632 = vsyncadd [#allocation13], %s1631
          %s1634 = sshll.u32 [#allocation14], 4
          %s1635 = int_to_ptr.vmem [resolvable:$true] %s1634
          %1637 = dma.vmem_to_hbm [thread:$0]  %s1635, 64, %s16, [#allocation13]
        $region246: #{tpu_custom_call.1} parent=101 // pred_fallthru
          _
        // Predicated region
        $region247: #{tpu_custom_call.1} parent=101 // pred_check
          %p1638 = pneg %p306
        $region248: #{tpu_custom_call.1} parent=101 // pred_check_branch
          %1640 = sbr.rel (%p1638) target = $region250
        $region249: #{tpu_custom_call.1} parent=101 // pred_region
          %1641 = dma.done [#allocation11], 256
        $region250: #{tpu_custom_call.1} parent=101 // pred_fallthru
          _
        // Predicated region
        $region251: #{tpu_custom_call.1} parent=101 // pred_check
          %p1642 = pneg %p327
        $region252: #{tpu_custom_call.1} parent=101 // pred_check_branch
          %1644 = sbr.rel (%p1642) target = $region254
        $region253: #{tpu_custom_call.1} parent=101 // pred_region
          %1645 = dma.done [#allocation13], 64
        $region254: #{tpu_custom_call.1} parent=101 // pred_fallthru
          _
        // Predicated region
        $region255: #{tpu_custom_call.1} parent=101 // pred_check
          %p1646 = pneg %p348
        $region256: #{tpu_custom_call.1} parent=101 // pred_check_branch
          %1648 = sbr.rel (%p1646) target = $region258
        $region257: #{tpu_custom_call.1} parent=101 // pred_region
          %1649 = dma.done [#allocation13], 64
        $region258: #{tpu_custom_call.1} parent=101 // pred_fallthru
          _
      $region102: #{tpu_custom_call.1} parent=5 // pred_fallthru
        _
      %p1650 = scmp.le.s32.totalorder 2, %s31
      // Predicated region
      $region259: #{tpu_custom_call.1} parent=5 // pred_check
        %p1651 = pneg %p1650
      $region260: #{tpu_custom_call.1} parent=5 // pred_check_branch
        %1653 = sbr.rel (%p1651) target = $region262
      $region261: #{tpu_custom_call.1} parent=5 // pred_region
        %s1654 = ssub.s32 %s31, 2
      $region262: #{tpu_custom_call.1} parent=5 // pred_fallthru
        _
    $region6: #{tpu_custom_call.1} parent=1 // loop_footer
      %s35 = sadd.s32 1, %s31
    $region7: #{tpu_custom_call.1} parent=1 // loop_footer_branch
      %30 = sbr.rel target = $region3
    $region8: #{tpu_custom_call.1} parent=1 // loop_exit
      _
    %1655 = vsyncpa [#allocation11], 1
    %s1656 = scalar_lea.sflag [#allocation11], 1
    %1657 = vsyncpa %s1656, 1
    %1658 = vsyncpa [#allocation13], 1
  %1659 = vsyncmov [#allocation3]
  %s1660 = vpop.sfrf %1659
  %p1661 = scmp.eq.s32.totalorder %s1660, 0
  %p1662 = pneg %p1661
  %1664 = shalt.err (%p1662)
  %s1665 = scalar_lea.sflag [#allocation3], 1
  %1666 = vsyncmov %s1665
  %s1667 = vpop.sfrf %1666
  %p1668 = scmp.eq.s32.totalorder %s1667, 0
  %p1669 = pneg %p1668
  %1671 = shalt.err (%p1669)
  %s1672 = scalar_lea.sflag [#allocation3], 2
  %1673 = vsyncmov %s1672
  %s1674 = vpop.sfrf %1673
  %p1675 = scmp.eq.s32.totalorder %s1674, 0
  %p1676 = pneg %p1675
  %1678 = shalt.err (%p1676)
  %s1679 = scalar_lea.sflag [#allocation3], 3
  %1680 = vsyncmov %s1679
  %s1681 = vpop.sfrf %1680
  %p1682 = scmp.eq.s32.totalorder %s1681, 0
  %p1683 = pneg %p1682
  %1685 = shalt.err (%p1683)

</llo_original>
